<compile_context>
chip_gen: v7x
topology: tpu7x:2x2x1
jax: 0.10.0
libtpu: 0.0.40
codegen_flags: <defaults>
</compile_context>

<pallas_src>
import jax
import jax.numpy as jnp
from jax.experimental import pallas as pl
from jax.experimental.pallas import tpu as pltpu

BN_EPS = 1e-5


def _round_up(x, m):
    return (x + m - 1) // m * m


def make_mixer_kernel(batch_true, tile_rows, mask_rows):
    inv_b = 1.0 / float(batch_true)

    def kernel(x_ref, noise_ref,
               w1_ref, g1_ref, be1_ref,
               w2_ref, g2_ref, be2_ref,
               w3_ref, b3_ref,
               o_ref,
               sum1_ref, sq1_ref, sum2_ref, sq2_ref,
               scale1_ref, shift1_ref, scale2_ref, shift2_ref):
        p = pl.program_id(0)     # 0: BN1 stats, 1: BN2 stats, 2: output sweep
        i = pl.program_id(1)     # batch tile

        # noise injection + linear1 (bias dropped: cancelled by BN mean-sub)
        x = x_ref[...] + noise_ref[...]                       # f32 (TB, s)
        z1 = jnp.dot(x.astype(jnp.bfloat16), w1_ref[...],
                     preferred_element_type=jnp.float32)      # f32 (TB, H)

        def masked(z):
            # rows beyond the true batch (zero padding) must not pollute stats
            if not mask_rows:
                return z
            row = (jax.lax.broadcasted_iota(jnp.int32, (tile_rows, 1), 0)
                   + i * tile_rows)
            return jnp.where(row < batch_true, z, 0.0)

        @pl.when(p == 0)
        def _():
            @pl.when(i == 0)
            def _():
                sum1_ref[...] = jnp.zeros_like(sum1_ref)
                sq1_ref[...] = jnp.zeros_like(sq1_ref)
            zm = masked(z1)
            sum1_ref[...] += jnp.sum(zm, axis=0, keepdims=True)
            sq1_ref[...] += jnp.sum(zm * zm, axis=0, keepdims=True)

        @pl.when(p > 0)
        def _():
            # BN1 scale/shift: computed once at the start of pass 1, reused
            # (from persistent scratch) for every tile of passes 1 and 2.
            @pl.when(jnp.logical_and(p == 1, i == 0))
            def _():
                mu1 = sum1_ref[...] * inv_b
                var1 = jnp.maximum(sq1_ref[...] * inv_b - mu1 * mu1, 0.0)
                sc1 = g1_ref[...] * jax.lax.rsqrt(var1 + BN_EPS)
                scale1_ref[...] = sc1
                shift1_ref[...] = be1_ref[...] - mu1 * sc1

            h1 = jnp.maximum(z1 * scale1_ref[...] + shift1_ref[...], 0.0)

            z2 = jnp.dot(h1.astype(jnp.bfloat16), w2_ref[...],
                         preferred_element_type=jnp.float32)  # f32 (TB, H)

            @pl.when(p == 1)
            def _():
                @pl.when(i == 0)
                def _():
                    sum2_ref[...] = jnp.zeros_like(sum2_ref)
                    sq2_ref[...] = jnp.zeros_like(sq2_ref)
                zm = masked(z2)
                sum2_ref[...] += jnp.sum(zm, axis=0, keepdims=True)
                sq2_ref[...] += jnp.sum(zm * zm, axis=0, keepdims=True)

            @pl.when(p == 2)
            def _():
                # BN2 scale/shift: computed once at the start of pass 2.
                @pl.when(i == 0)
                def _():
                    mu2 = sum2_ref[...] * inv_b
                    var2 = jnp.maximum(sq2_ref[...] * inv_b - mu2 * mu2, 0.0)
                    sc2 = g2_ref[...] * jax.lax.rsqrt(var2 + BN_EPS)
                    scale2_ref[...] = sc2
                    shift2_ref[...] = be2_ref[...] - mu2 * sc2

                h2 = jnp.maximum(z2 * scale2_ref[...] + shift2_ref[...], 0.0)
                y = jnp.dot(h2.astype(jnp.bfloat16), w3_ref[...],
                            preferred_element_type=jnp.float32) + b3_ref[...]
                o_ref[...] = y.astype(o_ref.dtype)
            # On passes 0/1 o_ref is left untouched; whatever the buffer holds
            # is (harmlessly) written back and then overwritten by the pass-2
            # sweep, which runs last for every batch tile.

    return kernel


def mixer_forward(x, noise, params, *, block_rows=1024):
    """x: any shape whose element count is divisible by s (flattened to (B, s)).
    noise: (B, s) sigma-0.01 gaussian (same flattened size as x)."""
    s, hidden = params["w1"].shape
    out_dim = params["w3"].shape[1]

    x2d = x.reshape(-1, s).astype(jnp.float32)
    noise2d = noise.reshape(-1, s).astype(jnp.float32)
    B = x2d.shape[0]

    # batch tile: multiple of 8 sublanes, capped so the live tile footprint
    # (a few * TB * 256 * 4B) stays well inside v5e/v7x scoped-VMEM budgets.
    tb = min(_round_up(block_rows, 8), _round_up(B, 8))
    b_pad = _round_up(B, tb)
    if b_pad != B:
        x2d = jnp.pad(x2d, ((0, b_pad - B), (0, 0)))
        noise2d = jnp.pad(noise2d, ((0, b_pad - B), (0, 0)))
    nb = b_pad // tb
    mask_rows = b_pad != B   # compile the stats mask out when batch is exact

    # bf16 weights (MXU-native); BN params and final bias stay f32.
    w1 = params["w1"].astype(jnp.bfloat16)
    w2 = params["w2"].astype(jnp.bfloat16)
    w3 = params["w3"].astype(jnp.bfloat16)
    g1, be1 = params["g1"], params["be1"]
    g2, be2 = params["g2"], params["be2"]
    b3 = params["b3"]

    kernel = make_mixer_kernel(B, tb, mask_rows)

    row_map = lambda p, i: (i, 0)      # streamed per batch tile
    const_map = lambda p, i: (0, 0)    # resident (DMA'd once)

    out = pl.pallas_call(
        kernel,
        out_shape=jax.ShapeDtypeStruct((b_pad, out_dim), jnp.float32),
        grid_spec=pltpu.PrefetchScalarGridSpec(
            num_scalar_prefetch=0,
            grid=(3, nb),                                   # (pass, batch tile)
            in_specs=[
                pl.BlockSpec((tb, s), row_map),             # x
                pl.BlockSpec((tb, s), row_map),             # noise
                pl.BlockSpec((s, hidden), const_map),       # w1 (bf16)
                pl.BlockSpec((1, hidden), const_map),       # gamma1
                pl.BlockSpec((1, hidden), const_map),       # beta1
                pl.BlockSpec((hidden, hidden), const_map),  # w2 (bf16)
                pl.BlockSpec((1, hidden), const_map),       # gamma2
                pl.BlockSpec((1, hidden), const_map),       # beta2
                pl.BlockSpec((hidden, out_dim), const_map), # w3 (bf16)
                pl.BlockSpec((1, out_dim), const_map),      # b3
            ],
            out_specs=pl.BlockSpec((tb, out_dim), row_map),
            scratch_shapes=[pltpu.VMEM((1, hidden), jnp.float32)] * 8,
        ),
        compiler_params=pltpu.CompilerParams(
            # both axes carry the BN accumulators / folded affines -> sequential
            dimension_semantics=("arbitrary", "arbitrary"),
            vmem_limit_bytes=32 * 1024 * 1024,
        ),
    )(x2d, noise2d, w1, g1, be1, w2, g2, be2, w3, b3)

    return out[:B]


def init_params(key, s, z, ngen, hidden=256):
    """nn.Linear-style init (uniform +-1/sqrt(fan_in)); BN gamma=1, beta=0.
    Weights stored pre-transposed as (in, out).  b1/b2 are omitted: a bias
    added immediately before training-mode BatchNorm is exactly cancelled."""
    ks = jax.random.split(key, 6)

    def lin(kw, kb, fan_in, fan_out):
        bound = 1.0 / jnp.sqrt(fan_in)
        w = jax.random.uniform(kw, (fan_in, fan_out), jnp.float32, -bound, bound)
        b = jax.random.uniform(kb, (1, fan_out), jnp.float32, -bound, bound)
        return w, b

    w1, _ = lin(ks[0], ks[1], s, hidden)
    w2, _ = lin(ks[2], ks[3], hidden, hidden)
    w3, b3 = lin(ks[4], ks[5], hidden, z * ngen)
    return dict(
        w1=w1, g1=jnp.ones((1, hidden), jnp.float32), be1=jnp.zeros((1, hidden), jnp.float32),
        w2=w2, g2=jnp.ones((1, hidden), jnp.float32), be2=jnp.zeros((1, hidden), jnp.float32),
        w3=w3, b3=b3,
    )


def reference_forward(x, noise, params):
    """Pure-JAX reference matching the kernel's precision choices
    (bf16 matmul operands, f32 accumulation / BN statistics)."""
    s = params["w1"].shape[0]
    h = (x.reshape(-1, s).astype(jnp.float32)
         + noise.reshape(-1, s).astype(jnp.float32))

    def dot_bf16(a, w):
        return jnp.dot(a.astype(jnp.bfloat16), w.astype(jnp.bfloat16),
                       preferred_element_type=jnp.float32)

    def bn_relu(z, g, be):
        mu = jnp.mean(z, axis=0, keepdims=True)
        var = jnp.mean((z - mu) ** 2, axis=0, keepdims=True)
        scale = g * jax.lax.rsqrt(var + BN_EPS)
        shift = be - mu * scale
        return jnp.maximum(z * scale + shift, 0.0)

    h1 = bn_relu(dot_bf16(h, params["w1"]), params["g1"], params["be1"])
    h2 = bn_relu(dot_bf16(h1, params["w2"]), params["g2"], params["be2"])
    return dot_bf16(h2, params["w3"]) + params["b3"]


if __name__ == "__main__":
    # module args: s=32, z=8, ngen=4, bias=True  -> output dim = z*ngen = 32
    s, z, ngen = 32, 8, 4
    key = jax.random.PRNGKey(0)
    kx, kn, kp, kx2, kn2 = jax.random.split(key, 5)

    params = init_params(kp, s, z, ngen)

    # test 1: input (2, 4, 32) -> flattened batch of 8 rows (single tile,
    # exact batch, mask compiled out)
    x = jax.random.normal(kx, (2, 4, s), dtype=jnp.float32)
    noise = 0.01 * jax.random.normal(kn, (x.size // s, s), dtype=jnp.float32)
    out = jax.block_until_ready(mixer_forward(x, noise, params))
    ref = reference_forward(x, noise, params)
    assert out.shape == (8, z * ngen), out.shape
    assert jnp.allclose(out, ref, atol=5e-3, rtol=5e-3), \
        float(jnp.max(jnp.abs(out - ref)))

    # test 2: batch of 20 rows with forced 8-row tiles -> exercises multi-tile
    # partial-statistics accumulation and padded-row masking (pads to 24).
    x2 = jax.random.normal(kx2, (20, s), dtype=jnp.float32)
    noise2 = 0.01 * jax.random.normal(kn2, (20, s), dtype=jnp.float32)
    out2 = jax.block_until_ready(mixer_forward(x2, noise2, params, block_rows=8))
    ref2 = reference_forward(x2, noise2, params)
    assert out2.shape == (20, z * ngen), out2.shape
    assert jnp.allclose(out2, ref2, atol=5e-3, rtol=5e-3), \
        float(jnp.max(jnp.abs(out2 - ref2)))

    print("KERNEL_OK")
</pallas_src>

<mosaic_0001>
module attributes {stable_mosaic.version = 11 : i64} {
  func.func @kernel(%arg0: i32, %arg1: i32, %arg2: memref<8x32xf32, #tpu.memory_space<vmem>>, %arg3: memref<8x32xf32, #tpu.memory_space<vmem>>, %arg4: memref<32x256xbf16, #tpu.memory_space<vmem>>, %arg5: memref<1x256xf32, #tpu.memory_space<vmem>>, %arg6: memref<1x256xf32, #tpu.memory_space<vmem>>, %arg7: memref<256x256xbf16, #tpu.memory_space<vmem>>, %arg8: memref<1x256xf32, #tpu.memory_space<vmem>>, %arg9: memref<1x256xf32, #tpu.memory_space<vmem>>, %arg10: memref<256x32xbf16, #tpu.memory_space<vmem>>, %arg11: memref<1x32xf32, #tpu.memory_space<vmem>>, %arg12: memref<8x32xf32, #tpu.memory_space<vmem>>, %arg13: memref<1x256xf32, #tpu.memory_space<vmem>>, %arg14: memref<1x256xf32, #tpu.memory_space<vmem>>, %arg15: memref<1x256xf32, #tpu.memory_space<vmem>>, %arg16: memref<1x256xf32, #tpu.memory_space<vmem>>, %arg17: memref<1x256xf32, #tpu.memory_space<vmem>>, %arg18: memref<1x256xf32, #tpu.memory_space<vmem>>, %arg19: memref<1x256xf32, #tpu.memory_space<vmem>>, %arg20: memref<1x256xf32, #tpu.memory_space<vmem>>) attributes {dimension_semantics = [#tpu.dimension_semantics<arbitrary>, #tpu.dimension_semantics<arbitrary>], iteration_bounds = array<i64: 3, 1>, scalar_prefetch = 0 : i64, scratch_operands = 8 : i64, tpu.core_type = #tpu.core_type<tc>, window_params = [{transform_indices = @transform_0, window_bounds = array<i64: 8, 32>}, {transform_indices = @transform_1, window_bounds = array<i64: 8, 32>}, {pipeline_mode = #tpu.pipeline_mode<synchronous>, transform_indices = @transform_2, window_bounds = array<i64: 32, 256>}, {pipeline_mode = #tpu.pipeline_mode<synchronous>, transform_indices = @transform_3, window_bounds = array<i64: 1, 256>}, {pipeline_mode = #tpu.pipeline_mode<synchronous>, transform_indices = @transform_4, window_bounds = array<i64: 1, 256>}, {pipeline_mode = #tpu.pipeline_mode<synchronous>, transform_indices = @transform_5, window_bounds = array<i64: 256, 256>}, {pipeline_mode = #tpu.pipeline_mode<synchronous>, transform_indices = @transform_6, window_bounds = array<i64: 1, 256>}, {pipeline_mode = #tpu.pipeline_mode<synchronous>, transform_indices = @transform_7, window_bounds = array<i64: 1, 256>}, {pipeline_mode = #tpu.pipeline_mode<synchronous>, transform_indices = @transform_8, window_bounds = array<i64: 256, 32>}, {pipeline_mode = #tpu.pipeline_mode<synchronous>, transform_indices = @transform_9, window_bounds = array<i64: 1, 32>}, {transform_indices = @transform_10, window_bounds = array<i64: 8, 32>}]} {
    %c0 = arith.constant 0 : index
    %c0_0 = arith.constant 0 : index
    %0 = vector.load %arg2[%c0, %c0_0] : memref<8x32xf32, #tpu.memory_space<vmem>>, vector<8x32xf32>
    %c0_1 = arith.constant 0 : index
    %c0_2 = arith.constant 0 : index
    %1 = vector.load %arg3[%c0_1, %c0_2] : memref<8x32xf32, #tpu.memory_space<vmem>>, vector<8x32xf32>
    %2 = arith.addf %0, %1 : vector<8x32xf32>
    %3 = arith.truncf %2 : vector<8x32xf32> to vector<8x32xbf16>
    %c0_3 = arith.constant 0 : index
    %c0_4 = arith.constant 0 : index
    %4 = vector.load %arg4[%c0_3, %c0_4] : memref<32x256xbf16, #tpu.memory_space<vmem>>, vector<32x256xbf16>
    %cst = arith.constant dense<0.000000e+00> : vector<8x256xf32>
    %5 = tpu.matmul %3, %4, %cst {dimension_numbers = #tpu.dot_dimension_numbers<[1], [0], [0], [1], [0, 0, 1, 1], [], []>} : vector<8x32xbf16>, vector<32x256xbf16>, vector<8x256xf32> -> vector<8x256xf32>
    %c0_i32 = arith.constant 0 : i32
    %6 = arith.cmpi eq, %arg0, %c0_i32 : i32
    %7 = arith.extui %6 : i1 to i32
    %c0_i32_5 = arith.constant 0 : i32
    %8 = arith.cmpi ne, %7, %c0_i32_5 : i32
    scf.if %8 {
      %c0_i32_8 = arith.constant 0 : i32
      %12 = arith.cmpi eq, %arg1, %c0_i32_8 : i32
      %13 = arith.extui %12 : i1 to i32
      %c0_i32_9 = arith.constant 0 : i32
      %14 = arith.cmpi ne, %13, %c0_i32_9 : i32
      scf.if %14 {
        %cst_20 = arith.constant 0.000000e+00 : f32
        %26 = vector.broadcast %cst_20 : f32 to vector<1x256xf32>
        %c0_21 = arith.constant 0 : index
        %c0_22 = arith.constant 0 : index
        %27 = vector.load %arg13[%c0_21, %c0_22] : memref<1x256xf32, #tpu.memory_space<vmem>>, vector<1x256xf32>
        tpu.vector_store %arg13[%c0_21, %c0_22], %26 {strides = array<i32>} : memref<1x256xf32, #tpu.memory_space<vmem>>, vector<1x256xf32>,
        %cst_23 = arith.constant 0.000000e+00 : f32
        %28 = vector.broadcast %cst_23 : f32 to vector<1x256xf32>
        %c0_24 = arith.constant 0 : index
        %c0_25 = arith.constant 0 : index
        %29 = vector.load %arg14[%c0_24, %c0_25] : memref<1x256xf32, #tpu.memory_space<vmem>>, vector<1x256xf32>
        tpu.vector_store %arg14[%c0_24, %c0_25], %28 {strides = array<i32>} : memref<1x256xf32, #tpu.memory_space<vmem>>, vector<1x256xf32>,
      } else {
      }
      %c0_10 = arith.constant 0 : index
      %c0_11 = arith.constant 0 : index
      %15 = vector.load %arg13[%c0_10, %c0_11] : memref<1x256xf32, #tpu.memory_space<vmem>>, vector<1x256xf32>
      %cst_12 = arith.constant dense<0.000000e+00> : vector<256xf32>
      %16 = vector.multi_reduction <add>, %5, %cst_12 [0] : vector<8x256xf32> to vector<256xf32>
      %17 = vector.shape_cast %16 : vector<256xf32> to vector<1x256xf32>
      %18 = arith.addf %15, %17 : vector<1x256xf32>
      %c0_13 = arith.constant 0 : index
      %c0_14 = arith.constant 0 : index
      %19 = vector.load %arg13[%c0_13, %c0_14] : memref<1x256xf32, #tpu.memory_space<vmem>>, vector<1x256xf32>
      tpu.vector_store %arg13[%c0_13, %c0_14], %18 {strides = array<i32>} : memref<1x256xf32, #tpu.memory_space<vmem>>, vector<1x256xf32>,
      %c0_15 = arith.constant 0 : index
      %c0_16 = arith.constant 0 : index
      %20 = vector.load %arg14[%c0_15, %c0_16] : memref<1x256xf32, #tpu.memory_space<vmem>>, vector<1x256xf32>
      %21 = arith.mulf %5, %5 : vector<8x256xf32>
      %cst_17 = arith.constant dense<0.000000e+00> : vector<256xf32>
      %22 = vector.multi_reduction <add>, %21, %cst_17 [0] : vector<8x256xf32> to vector<256xf32>
      %23 = vector.shape_cast %22 : vector<256xf32> to vector<1x256xf32>
      %24 = arith.addf %20, %23 : vector<1x256xf32>
      %c0_18 = arith.constant 0 : index
      %c0_19 = arith.constant 0 : index
      %25 = vector.load %arg14[%c0_18, %c0_19] : memref<1x256xf32, #tpu.memory_space<vmem>>, vector<1x256xf32>
      tpu.vector_store %arg14[%c0_18, %c0_19], %24 {strides = array<i32>} : memref<1x256xf32, #tpu.memory_space<vmem>>, vector<1x256xf32>,
    } else {
    }
    %c0_i32_6 = arith.constant 0 : i32
    %9 = arith.cmpi sgt, %arg0, %c0_i32_6 : i32
    %10 = arith.extui %9 : i1 to i32
    %c0_i32_7 = arith.constant 0 : i32
    %11 = arith.cmpi ne, %10, %c0_i32_7 : i32
    scf.if %11 {
      %c1_i32 = arith.constant 1 : i32
      %12 = arith.cmpi eq, %arg0, %c1_i32 : i32
      %c0_i32_8 = arith.constant 0 : i32
      %13 = arith.cmpi eq, %arg1, %c0_i32_8 : i32
      %14 = arith.andi %12, %13 : i1
      %15 = arith.extui %14 : i1 to i32
      %c0_i32_9 = arith.constant 0 : i32
      %16 = arith.cmpi ne, %15, %c0_i32_9 : i32
      scf.if %16 {
        %c0_21 = arith.constant 0 : index
        %c0_22 = arith.constant 0 : index
        %34 = vector.load %arg13[%c0_21, %c0_22] : memref<1x256xf32, #tpu.memory_space<vmem>>, vector<1x256xf32>
        %cst_23 = arith.constant 1.250000e-01 : f32
        %35 = vector.broadcast %cst_23 : f32 to vector<1x256xf32>
        %36 = arith.mulf %34, %35 : vector<1x256xf32>
        %c0_24 = arith.constant 0 : index
        %c0_25 = arith.constant 0 : index
        %37 = vector.load %arg14[%c0_24, %c0_25] : memref<1x256xf32, #tpu.memory_space<vmem>>, vector<1x256xf32>
        %cst_26 = arith.constant 1.250000e-01 : f32
        %38 = vector.broadcast %cst_26 : f32 to vector<1x256xf32>
        %39 = arith.mulf %37, %38 : vector<1x256xf32>
        %40 = arith.mulf %36, %36 : vector<1x256xf32>
        %41 = arith.subf %39, %40 : vector<1x256xf32>
        %cst_27 = arith.constant 0.000000e+00 : f32
        %42 = vector.broadcast %cst_27 : f32 to vector<1x256xf32>
        %43 = arith.maximumf %41, %42 : vector<1x256xf32>
        %c0_28 = arith.constant 0 : index
        %c0_29 = arith.constant 0 : index
        %44 = vector.load %arg5[%c0_28, %c0_29] : memref<1x256xf32, #tpu.memory_space<vmem>>, vector<1x256xf32>
        %cst_30 = arith.constant 9.99999974E-6 : f32
        %45 = vector.broadcast %cst_30 : f32 to vector<1x256xf32>
        %46 = arith.addf %43, %45 : vector<1x256xf32>
        %47 = math.rsqrt %46 : vector<1x256xf32>
        %48 = arith.mulf %44, %47 : vector<1x256xf32>
        %c0_31 = arith.constant 0 : index
        %c0_32 = arith.constant 0 : index
        %49 = vector.load %arg17[%c0_31, %c0_32] : memref<1x256xf32, #tpu.memory_space<vmem>>, vector<1x256xf32>
        tpu.vector_store %arg17[%c0_31, %c0_32], %48 {strides = array<i32>} : memref<1x256xf32, #tpu.memory_space<vmem>>, vector<1x256xf32>,
        %c0_33 = arith.constant 0 : index
        %c0_34 = arith.constant 0 : index
        %50 = vector.load %arg6[%c0_33, %c0_34] : memref<1x256xf32, #tpu.memory_space<vmem>>, vector<1x256xf32>
        %51 = arith.mulf %36, %48 : vector<1x256xf32>
        %52 = arith.subf %50, %51 : vector<1x256xf32>
        %c0_35 = arith.constant 0 : index
        %c0_36 = arith.constant 0 : index
        %53 = vector.load %arg18[%c0_35, %c0_36] : memref<1x256xf32, #tpu.memory_space<vmem>>, vector<1x256xf32>
        tpu.vector_store %arg18[%c0_35, %c0_36], %52 {strides = array<i32>} : memref<1x256xf32, #tpu.memory_space<vmem>>, vector<1x256xf32>,
      } else {
      }
      %c0_10 = arith.constant 0 : index
      %c0_11 = arith.constant 0 : index
      %17 = vector.load %arg17[%c0_10, %c0_11] : memref<1x256xf32, #tpu.memory_space<vmem>>, vector<1x256xf32>
      %18 = vector.broadcast %17 : vector<1x256xf32> to vector<8x256xf32>
      %19 = arith.mulf %5, %18 : vector<8x256xf32>
      %c0_12 = arith.constant 0 : index
      %c0_13 = arith.constant 0 : index
      %20 = vector.load %arg18[%c0_12, %c0_13] : memref<1x256xf32, #tpu.memory_space<vmem>>, vector<1x256xf32>
      %21 = vector.broadcast %20 : vector<1x256xf32> to vector<8x256xf32>
      %22 = arith.addf %19, %21 : vector<8x256xf32>
      %cst_14 = arith.constant 0.000000e+00 : f32
      %23 = vector.broadcast %cst_14 : f32 to vector<8x256xf32>
      %24 = arith.maximumf %22, %23 : vector<8x256xf32>
      %25 = arith.truncf %24 : vector<8x256xf32> to vector<8x256xbf16>
      %c0_15 = arith.constant 0 : index
      %c0_16 = arith.constant 0 : index
      %26 = vector.load %arg7[%c0_15, %c0_16] : memref<256x256xbf16, #tpu.memory_space<vmem>>, vector<256x256xbf16>
      %cst_17 = arith.constant dense<0.000000e+00> : vector<8x256xf32>
      %27 = tpu.matmul %25, %26, %cst_17 {dimension_numbers = #tpu.dot_dimension_numbers<[1], [0], [0], [1], [0, 0, 1, 1], [], []>} : vector<8x256xbf16>, vector<256x256xbf16>, vector<8x256xf32> -> vector<8x256xf32>
      %c1_i32_18 = arith.constant 1 : i32
      %28 = arith.cmpi eq, %arg0, %c1_i32_18 : i32
      %29 = arith.extui %28 : i1 to i32
      %c0_i32_19 = arith.constant 0 : i32
      %30 = arith.cmpi ne, %29, %c0_i32_19 : i32
      scf.if %30 {
        %c0_i32_21 = arith.constant 0 : i32
        %34 = arith.cmpi eq, %arg1, %c0_i32_21 : i32
        %35 = arith.extui %34 : i1 to i32
        %c0_i32_22 = arith.constant 0 : i32
        %36 = arith.cmpi ne, %35, %c0_i32_22 : i32
        scf.if %36 {
          %cst_33 = arith.constant 0.000000e+00 : f32
          %48 = vector.broadcast %cst_33 : f32 to vector<1x256xf32>
          %c0_34 = arith.constant 0 : index
          %c0_35 = arith.constant 0 : index
          %49 = vector.load %arg15[%c0_34, %c0_35] : memref<1x256xf32, #tpu.memory_space<vmem>>, vector<1x256xf32>
          tpu.vector_store %arg15[%c0_34, %c0_35], %48 {strides = array<i32>} : memref<1x256xf32, #tpu.memory_space<vmem>>, vector<1x256xf32>,
          %cst_36 = arith.constant 0.000000e+00 : f32
          %50 = vector.broadcast %cst_36 : f32 to vector<1x256xf32>
          %c0_37 = arith.constant 0 : index
          %c0_38 = arith.constant 0 : index
          %51 = vector.load %arg16[%c0_37, %c0_38] : memref<1x256xf32, #tpu.memory_space<vmem>>, vector<1x256xf32>
          tpu.vector_store %arg16[%c0_37, %c0_38], %50 {strides = array<i32>} : memref<1x256xf32, #tpu.memory_space<vmem>>, vector<1x256xf32>,
        } else {
        }
        %c0_23 = arith.constant 0 : index
        %c0_24 = arith.constant 0 : index
        %37 = vector.load %arg15[%c0_23, %c0_24] : memref<1x256xf32, #tpu.memory_space<vmem>>, vector<1x256xf32>
        %cst_25 = arith.constant dense<0.000000e+00> : vector<256xf32>
        %38 = vector.multi_reduction <add>, %27, %cst_25 [0] : vector<8x256xf32> to vector<256xf32>
        %39 = vector.shape_cast %38 : vector<256xf32> to vector<1x256xf32>
        %40 = arith.addf %37, %39 : vector<1x256xf32>
        %c0_26 = arith.constant 0 : index
        %c0_27 = arith.constant 0 : index
        %41 = vector.load %arg15[%c0_26, %c0_27] : memref<1x256xf32, #tpu.memory_space<vmem>>, vector<1x256xf32>
        tpu.vector_store %arg15[%c0_26, %c0_27], %40 {strides = array<i32>} : memref<1x256xf32, #tpu.memory_space<vmem>>, vector<1x256xf32>,
        %c0_28 = arith.constant 0 : index
        %c0_29 = arith.constant 0 : index
        %42 = vector.load %arg16[%c0_28, %c0_29] : memref<1x256xf32, #tpu.memory_space<vmem>>, vector<1x256xf32>
        %43 = arith.mulf %27, %27 : vector<8x256xf32>
        %cst_30 = arith.constant dense<0.000000e+00> : vector<256xf32>
        %44 = vector.multi_reduction <add>, %43, %cst_30 [0] : vector<8x256xf32> to vector<256xf32>
        %45 = vector.shape_cast %44 : vector<256xf32> to vector<1x256xf32>
        %46 = arith.addf %42, %45 : vector<1x256xf32>
        %c0_31 = arith.constant 0 : index
        %c0_32 = arith.constant 0 : index
        %47 = vector.load %arg16[%c0_31, %c0_32] : memref<1x256xf32, #tpu.memory_space<vmem>>, vector<1x256xf32>
        tpu.vector_store %arg16[%c0_31, %c0_32], %46 {strides = array<i32>} : memref<1x256xf32, #tpu.memory_space<vmem>>, vector<1x256xf32>,
      } else {
      }
      %c2_i32 = arith.constant 2 : i32
      %31 = arith.cmpi eq, %arg0, %c2_i32 : i32
      %32 = arith.extui %31 : i1 to i32
      %c0_i32_20 = arith.constant 0 : i32
      %33 = arith.cmpi ne, %32, %c0_i32_20 : i32
      scf.if %33 {
        %c0_i32_21 = arith.constant 0 : i32
        %34 = arith.cmpi eq, %arg1, %c0_i32_21 : i32
        %35 = arith.extui %34 : i1 to i32
        %c0_i32_22 = arith.constant 0 : i32
        %36 = arith.cmpi ne, %35, %c0_i32_22 : i32
        scf.if %36 {
          %c0_35 = arith.constant 0 : index
          %c0_36 = arith.constant 0 : index
          %52 = vector.load %arg15[%c0_35, %c0_36] : memref<1x256xf32, #tpu.memory_space<vmem>>, vector<1x256xf32>
          %cst_37 = arith.constant 1.250000e-01 : f32
          %53 = vector.broadcast %cst_37 : f32 to vector<1x256xf32>
          %54 = arith.mulf %52, %53 : vector<1x256xf32>
          %c0_38 = arith.constant 0 : index
          %c0_39 = arith.constant 0 : index
          %55 = vector.load %arg16[%c0_38, %c0_39] : memref<1x256xf32, #tpu.memory_space<vmem>>, vector<1x256xf32>
          %cst_40 = arith.constant 1.250000e-01 : f32
          %56 = vector.broadcast %cst_40 : f32 to vector<1x256xf32>
          %57 = arith.mulf %55, %56 : vector<1x256xf32>
          %58 = arith.mulf %54, %54 : vector<1x256xf32>
          %59 = arith.subf %57, %58 : vector<1x256xf32>
          %cst_41 = arith.constant 0.000000e+00 : f32
          %60 = vector.broadcast %cst_41 : f32 to vector<1x256xf32>
          %61 = arith.maximumf %59, %60 : vector<1x256xf32>
          %c0_42 = arith.constant 0 : index
          %c0_43 = arith.constant 0 : index
          %62 = vector.load %arg8[%c0_42, %c0_43] : memref<1x256xf32, #tpu.memory_space<vmem>>, vector<1x256xf32>
          %cst_44 = arith.constant 9.99999974E-6 : f32
          %63 = vector.broadcast %cst_44 : f32 to vector<1x256xf32>
          %64 = arith.addf %61, %63 : vector<1x256xf32>
          %65 = math.rsqrt %64 : vector<1x256xf32>
          %66 = arith.mulf %62, %65 : vector<1x256xf32>
          %c0_45 = arith.constant 0 : index
          %c0_46 = arith.constant 0 : index
          %67 = vector.load %arg19[%c0_45, %c0_46] : memref<1x256xf32, #tpu.memory_space<vmem>>, vector<1x256xf32>
          tpu.vector_store %arg19[%c0_45, %c0_46], %66 {strides = array<i32>} : memref<1x256xf32, #tpu.memory_space<vmem>>, vector<1x256xf32>,
          %c0_47 = arith.constant 0 : index
          %c0_48 = arith.constant 0 : index
          %68 = vector.load %arg9[%c0_47, %c0_48] : memref<1x256xf32, #tpu.memory_space<vmem>>, vector<1x256xf32>
          %69 = arith.mulf %54, %66 : vector<1x256xf32>
          %70 = arith.subf %68, %69 : vector<1x256xf32>
          %c0_49 = arith.constant 0 : index
          %c0_50 = arith.constant 0 : index
          %71 = vector.load %arg20[%c0_49, %c0_50] : memref<1x256xf32, #tpu.memory_space<vmem>>, vector<1x256xf32>
          tpu.vector_store %arg20[%c0_49, %c0_50], %70 {strides = array<i32>} : memref<1x256xf32, #tpu.memory_space<vmem>>, vector<1x256xf32>,
        } else {
        }
        %c0_23 = arith.constant 0 : index
        %c0_24 = arith.constant 0 : index
        %37 = vector.load %arg19[%c0_23, %c0_24] : memref<1x256xf32, #tpu.memory_space<vmem>>, vector<1x256xf32>
        %38 = vector.broadcast %37 : vector<1x256xf32> to vector<8x256xf32>
        %39 = arith.mulf %27, %38 : vector<8x256xf32>
        %c0_25 = arith.constant 0 : index
        %c0_26 = arith.constant 0 : index
        %40 = vector.load %arg20[%c0_25, %c0_26] : memref<1x256xf32, #tpu.memory_space<vmem>>, vector<1x256xf32>
        %41 = vector.broadcast %40 : vector<1x256xf32> to vector<8x256xf32>
        %42 = arith.addf %39, %41 : vector<8x256xf32>
        %cst_27 = arith.constant 0.000000e+00 : f32
        %43 = vector.broadcast %cst_27 : f32 to vector<8x256xf32>
        %44 = arith.maximumf %42, %43 : vector<8x256xf32>
        %45 = arith.truncf %44 : vector<8x256xf32> to vector<8x256xbf16>
        %c0_28 = arith.constant 0 : index
        %c0_29 = arith.constant 0 : index
        %46 = vector.load %arg10[%c0_28, %c0_29] : memref<256x32xbf16, #tpu.memory_space<vmem>>, vector<256x32xbf16>
        %cst_30 = arith.constant dense<0.000000e+00> : vector<8x32xf32>
        %47 = tpu.matmul %45, %46, %cst_30 {dimension_numbers = #tpu.dot_dimension_numbers<[1], [0], [0], [1], [0, 0, 1, 1], [], []>} : vector<8x256xbf16>, vector<256x32xbf16>, vector<8x32xf32> -> vector<8x32xf32>
        %c0_31 = arith.constant 0 : index
        %c0_32 = arith.constant 0 : index
        %48 = vector.load %arg11[%c0_31, %c0_32] : memref<1x32xf32, #tpu.memory_space<vmem>>, vector<1x32xf32>
        %49 = vector.broadcast %48 : vector<1x32xf32> to vector<8x32xf32>
        %50 = arith.addf %47, %49 : vector<8x32xf32>
        %c0_33 = arith.constant 0 : index
        %c0_34 = arith.constant 0 : index
        %51 = vector.load %arg12[%c0_33, %c0_34] : memref<8x32xf32, #tpu.memory_space<vmem>>, vector<8x32xf32>
        tpu.vector_store %arg12[%c0_33, %c0_34], %50 {strides = array<i32>} : memref<8x32xf32, #tpu.memory_space<vmem>>, vector<8x32xf32>,
      } else {
      }
    } else {
    }
    return
  }
  func.func @transform_0(%arg0: i32, %arg1: i32) -> (i32, i32) {
    %c0_i32 = arith.constant 0 : i32
    %c0_i32_0 = arith.constant 0 : i32
    return %arg1, %c0_i32 : i32, i32
  }
  func.func @transform_1(%arg0: i32, %arg1: i32) -> (i32, i32) {
    %c0_i32 = arith.constant 0 : i32
    %c0_i32_0 = arith.constant 0 : i32
    return %arg1, %c0_i32 : i32, i32
  }
  func.func @transform_2(%arg0: i32, %arg1: i32) -> (i32, i32) {
    %c0_i32 = arith.constant 0 : i32
    %c0_i32_0 = arith.constant 0 : i32
    %c0_i32_1 = arith.constant 0 : i32
    return %c0_i32, %c0_i32_0 : i32, i32
  }
  func.func @transform_3(%arg0: i32, %arg1: i32) -> (i32, i32) {
    %c0_i32 = arith.constant 0 : i32
    %c0_i32_0 = arith.constant 0 : i32
    %c0_i32_1 = arith.constant 0 : i32
    return %c0_i32, %c0_i32_0 : i32, i32
  }
  func.func @transform_4(%arg0: i32, %arg1: i32) -> (i32, i32) {
    %c0_i32 = arith.constant 0 : i32
    %c0_i32_0 = arith.constant 0 : i32
    %c0_i32_1 = arith.constant 0 : i32
    return %c0_i32, %c0_i32_0 : i32, i32
  }
  func.func @transform_5(%arg0: i32, %arg1: i32) -> (i32, i32) {
    %c0_i32 = arith.constant 0 : i32
    %c0_i32_0 = arith.constant 0 : i32
    %c0_i32_1 = arith.constant 0 : i32
    return %c0_i32, %c0_i32_0 : i32, i32
  }
  func.func @transform_6(%arg0: i32, %arg1: i32) -> (i32, i32) {
    %c0_i32 = arith.constant 0 : i32
    %c0_i32_0 = arith.constant 0 : i32
    %c0_i32_1 = arith.constant 0 : i32
    return %c0_i32, %c0_i32_0 : i32, i32
  }
  func.func @transform_7(%arg0: i32, %arg1: i32) -> (i32, i32) {
    %c0_i32 = arith.constant 0 : i32
    %c0_i32_0 = arith.constant 0 : i32
    %c0_i32_1 = arith.constant 0 : i32
    return %c0_i32, %c0_i32_0 : i32, i32
  }
  func.func @transform_8(%arg0: i32, %arg1: i32) -> (i32, i32) {
    %c0_i32 = arith.constant 0 : i32
    %c0_i32_0 = arith.constant 0 : i32
    %c0_i32_1 = arith.constant 0 : i32
    return %c0_i32, %c0_i32_0 : i32, i32
  }
  func.func @transform_9(%arg0: i32, %arg1: i32) -> (i32, i32) {
    %c0_i32 = arith.constant 0 : i32
    %c0_i32_0 = arith.constant 0 : i32
    %c0_i32_1 = arith.constant 0 : i32
    return %c0_i32, %c0_i32_0 : i32, i32
  }
  func.func @transform_10(%arg0: i32, %arg1: i32) -> (i32, i32) {
    %c0_i32 = arith.constant 0 : i32
    %c0_i32_0 = arith.constant 0 : i32
    return %arg1, %c0_i32 : i32, i32
  }
}

</mosaic_0001>

<llo_original>
// kernel: tpu_custom_call.1
$region0: #{tpu_custom_call.1}
  #allocation0 [shape = 'u32[]', space=smem, size = 0x4, offset = 0x4, fixed_abs, tag = 'smem constant byte address 0x4 - core index']
  #allocation1 [shape = 'u32[144,128]{1,0:T(1,128)}', space=vmem, size = 0x12000, scoped, tag = 'internal scratch']
  #allocation2 [shape = 'f32[1,256]{1,0:T(1,128)}', space=vmem, size = 0x400, scoped, tag = 'scratch operand']
  #allocation3 [shape = 'f32[1,256]{1,0:T(1,128)}', space=vmem, size = 0x400, scoped, tag = 'scratch operand']
  #allocation4 [shape = 'f32[1,256]{1,0:T(1,128)}', space=vmem, size = 0x400, scoped, tag = 'scratch operand']
  #allocation5 [shape = 'f32[1,256]{1,0:T(1,128)}', space=vmem, size = 0x400, scoped, tag = 'scratch operand']
  #allocation6 [shape = 'f32[1,256]{1,0:T(1,128)}', space=vmem, size = 0x400, scoped, tag = 'scratch operand']
  #allocation7 [shape = 'f32[1,256]{1,0:T(1,128)}', space=vmem, size = 0x400, scoped, tag = 'scratch operand']
  #allocation8 [shape = 'f32[1,256]{1,0:T(1,128)}', space=vmem, size = 0x400, scoped, tag = 'scratch operand']
  #allocation9 [shape = 'f32[1,256]{1,0:T(1,128)}', space=vmem, size = 0x400, scoped, tag = 'scratch operand']
  %s0 = inlined_call_operand.vmem [shape: f32[8,32], index: 0, kind: input, shape index: {}]
  %s1 = inlined_call_operand.vmem [shape: f32[8,32], index: 1, kind: input, shape index: {}]
  %s2 = inlined_call_operand.vmem [shape: bf16[32,256], index: 2, kind: input, shape index: {}]
  %s3 = inlined_call_operand.vmem [shape: f32[1,256], index: 3, kind: input, shape index: {}]
  %s4 = inlined_call_operand.vmem [shape: f32[1,256], index: 4, kind: input, shape index: {}]
  %s5 = inlined_call_operand.hbm [shape: bf16[256,256], index: 5, kind: input, shape index: {}]
  %s6 = inlined_call_operand.vmem [shape: f32[1,256], index: 6, kind: input, shape index: {}]
  %s7 = inlined_call_operand.vmem [shape: f32[1,256], index: 7, kind: input, shape index: {}]
  %s8 = inlined_call_operand.vmem [shape: bf16[256,32], index: 8, kind: input, shape index: {}]
  %s9 = inlined_call_operand.vmem [shape: f32[1,32], index: 9, kind: input, shape index: {}]
  %s10 = inlined_call_operand.hbm [shape: f32[8,32], index: 10, kind: output, shape index: {}]
  %s11 = sld [smem:[#allocation0]]
  $region109: #{tpu_custom_call.1} parent=0
    _
  %s13 = ssub.s32 1, %s11
  %s14 = scalar_select 0, %s13, %s11
  $region1: #{tpu_custom_call.1} parent=0
    #allocation10 [shape = 'u8[131072]{0}', space=vmem, size = 0x20000, scoped, tag = 'input window, operand 5, single buffered']
    #allocation11 [shape = 's32[2]{0}', space=sflag, size = 0x8, scoped, tag = 'scoped memory for tpu_custom_call.1']
    #allocation12 [shape = 's32[2]{0}', space=sflag, size = 0x8, scoped, tag = 'scoped memory for tpu_custom_call.1']
    #allocation13 [shape = 'u8[4096]{0}', space=vmem, size = 0x1000, scoped, tag = 'output window, operand 0, single buffered']
    %15 = vsyncpa [#allocation11], 0
    %16 = vsyncpa [#allocation12], 0
    loop: start=0, step=1, limit=5
    $region2: #{tpu_custom_call.1} parent=1 // loop_pre_header
      _
    $region3: #{tpu_custom_call.1} parent=1 // loop_header
      %s18 = sphi 0, %s22
      %p19 = scmp.ge.s32.totalorder %s18, 5
      %s25 = sphi 0, %s37
      %s26 = sphi 0, %s33
      %s27 = sphi 0, %s25
      %s28 = sphi 0, %s26
      %s29 = sphi 0, %s27
      %s30 = sphi 0, %s28
      %s40 = sphi 0, %s42
      %s43 = sphi 0, %s40
      %s44 = sphi 0, %s43
      %s60 = sphi 0, %s44
      %s66 = sphi 0, %s68
      %s69 = sphi 0, %s66
      %s70 = sphi 0, %s69
      %s86 = sphi 0, %s70
      %s90 = sphi 0, %s90
      %s92 = sphi 0, %s90
      %s93 = sphi 0, %s92
      %s107 = sphi 0, %s93
      %s111 = sphi 0, %s111
      %s113 = sphi 0, %s111
      %s114 = sphi 0, %s113
      %s128 = sphi 0, %s114
      %s132 = sphi 0, %s132
      %s134 = sphi 0, %s132
      %s135 = sphi 0, %s134
      %s149 = sphi 0, %s135
      %s153 = sphi 0, %s153
      %s155 = sphi 0, %s153
      %s156 = sphi 0, %s155
      %s170 = sphi 0, %s156
      %s174 = sphi 0, %s174
      %s176 = sphi 0, %s174
      %s177 = sphi 0, %s176
      %s191 = sphi 0, %s177
      %s195 = sphi 0, %s195
      %s197 = sphi 0, %s195
      %s198 = sphi 0, %s197
      %s212 = sphi 0, %s198
      %s216 = sphi 0, %s216
      %s218 = sphi 0, %s216
      %s219 = sphi 0, %s218
      %s233 = sphi 0, %s219
      %s237 = sphi 0, %s237
      %s239 = sphi 0, %s237
      %s240 = sphi 0, %s239
      %s254 = sphi 0, %s240
      %s260 = sphi 0, %s262
      %s263 = sphi 0, %s260
      %s264 = sphi 0, %s263
      %s280 = sphi 0, %s264
    $region4: #{tpu_custom_call.1} parent=1 // loop_header_branch
      %21 = sbr.rel (%p19) target = $region8
    $region5: #{tpu_custom_call.1} parent=1 // loop_body
      %s23 = ssub.s32 %s18, 1
      %s24 = ssub.s32 %s18, 2
      %s31 = sadd.s32 1, %s26
      %p32 = scmp.ge.s32.totalorder %s31, 1
      %s33 = scalar_select %p32, 0, %s31
      %s34 = sadd.s32 1, %s25
      %s35 = scalar_select %p32, %s34, %s25
      %p36 = scmp.ge.s32.totalorder %s35, 3
      %s37 = scalar_select %p36, 0, %s35
      %s38 = ssub.s32 %s26, %s33
      %p39 = scmp.eq.s32.totalorder %s38, 0
      %s41 = sadd.s32 %s40, 1
      %s42 = scalar_select %p39, %s40, %s41
      %p45 = pneg %p39
      %p46 = scmp.eq.s32.totalorder %s18, 2
      %p47 = por %p45, %p46
      %p48 = scmp.ne.s32.totalorder %s40, %s43
      %p49 = scmp.eq.s32.totalorder %s18, 0
      %p50 = por %p48, %p49
      %p51 = scmp.ne.s32.totalorder %s40, %s43
      %p52 = scmp.eq.s32.totalorder %s23, 2
      %p53 = por %p51, %p52
      %p54 = scmp.ne.s32.totalorder %s43, %s44
      %p55 = scmp.eq.s32.totalorder %s23, 0
      %p56 = por %p54, %p55
      %p57 = scmp.ne.s32.totalorder %s43, %s44
      %p58 = scmp.eq.s32.totalorder %s24, 2
      %p59 = por %p57, %p58
      %p61 = scmp.ne.s32.totalorder %s44, %s60
      %p62 = scmp.eq.s32.totalorder %s24, 0
      %p63 = por %p61, %p62
      %s64 = ssub.s32 %s26, %s33
      %p65 = scmp.eq.s32.totalorder %s64, 0
      %s67 = sadd.s32 %s66, 1
      %s68 = scalar_select %p65, %s66, %s67
      %p71 = pneg %p65
      %p72 = scmp.eq.s32.totalorder %s18, 2
      %p73 = por %p71, %p72
      %p74 = scmp.ne.s32.totalorder %s66, %s69
      %p75 = scmp.eq.s32.totalorder %s18, 0
      %p76 = por %p74, %p75
      %p77 = scmp.ne.s32.totalorder %s66, %s69
      %p78 = scmp.eq.s32.totalorder %s23, 2
      %p79 = por %p77, %p78
      %p80 = scmp.ne.s32.totalorder %s69, %s70
      %p81 = scmp.eq.s32.totalorder %s23, 0
      %p82 = por %p80, %p81
      %p83 = scmp.ne.s32.totalorder %s69, %s70
      %p84 = scmp.eq.s32.totalorder %s24, 2
      %p85 = por %p83, %p84
      %p87 = scmp.ne.s32.totalorder %s70, %s86
      %p88 = scmp.eq.s32.totalorder %s24, 0
      %p89 = por %p87, %p88
      %s91 = sadd.s32 %s90, 1
      %p94 = scmp.eq.s32.totalorder %s18, 2
      %p95 = scmp.ne.s32.totalorder %s90, %s92
      %p96 = scmp.eq.s32.totalorder %s18, 0
      %p97 = por %p95, %p96
      %p98 = scmp.ne.s32.totalorder %s90, %s92
      %p99 = scmp.eq.s32.totalorder %s23, 2
      %p100 = por %p98, %p99
      %p101 = scmp.ne.s32.totalorder %s92, %s93
      %p102 = scmp.eq.s32.totalorder %s23, 0
      %p103 = por %p101, %p102
      %p104 = scmp.ne.s32.totalorder %s92, %s93
      %p105 = scmp.eq.s32.totalorder %s24, 2
      %p106 = por %p104, %p105
      %p108 = scmp.ne.s32.totalorder %s93, %s107
      %p109 = scmp.eq.s32.totalorder %s24, 0
      %p110 = por %p108, %p109
      %s112 = sadd.s32 %s111, 1
      %p115 = scmp.eq.s32.totalorder %s18, 2
      %p116 = scmp.ne.s32.totalorder %s111, %s113
      %p117 = scmp.eq.s32.totalorder %s18, 0
      %p118 = por %p116, %p117
      %p119 = scmp.ne.s32.totalorder %s111, %s113
      %p120 = scmp.eq.s32.totalorder %s23, 2
      %p121 = por %p119, %p120
      %p122 = scmp.ne.s32.totalorder %s113, %s114
      %p123 = scmp.eq.s32.totalorder %s23, 0
      %p124 = por %p122, %p123
      %p125 = scmp.ne.s32.totalorder %s113, %s114
      %p126 = scmp.eq.s32.totalorder %s24, 2
      %p127 = por %p125, %p126
      %p129 = scmp.ne.s32.totalorder %s114, %s128
      %p130 = scmp.eq.s32.totalorder %s24, 0
      %p131 = por %p129, %p130
      %s133 = sadd.s32 %s132, 1
      %p136 = scmp.eq.s32.totalorder %s18, 2
      %p137 = scmp.ne.s32.totalorder %s132, %s134
      %p138 = scmp.eq.s32.totalorder %s18, 0
      %p139 = por %p137, %p138
      %p140 = scmp.ne.s32.totalorder %s132, %s134
      %p141 = scmp.eq.s32.totalorder %s23, 2
      %p142 = por %p140, %p141
      %p143 = scmp.ne.s32.totalorder %s134, %s135
      %p144 = scmp.eq.s32.totalorder %s23, 0
      %p145 = por %p143, %p144
      %p146 = scmp.ne.s32.totalorder %s134, %s135
      %p147 = scmp.eq.s32.totalorder %s24, 2
      %p148 = por %p146, %p147
      %p150 = scmp.ne.s32.totalorder %s135, %s149
      %p151 = scmp.eq.s32.totalorder %s24, 0
      %p152 = por %p150, %p151
      %s154 = sadd.s32 %s153, 1
      %p157 = scmp.eq.s32.totalorder %s18, 2
      %p158 = scmp.ne.s32.totalorder %s153, %s155
      %p159 = scmp.eq.s32.totalorder %s18, 0
      %p160 = por %p158, %p159
      %p161 = scmp.ne.s32.totalorder %s153, %s155
      %p162 = scmp.eq.s32.totalorder %s23, 2
      %p163 = por %p161, %p162
      %p164 = scmp.ne.s32.totalorder %s155, %s156
      %p165 = scmp.eq.s32.totalorder %s23, 0
      %p166 = por %p164, %p165
      %p167 = scmp.ne.s32.totalorder %s155, %s156
      %p168 = scmp.eq.s32.totalorder %s24, 2
      %p169 = por %p167, %p168
      %p171 = scmp.ne.s32.totalorder %s156, %s170
      %p172 = scmp.eq.s32.totalorder %s24, 0
      %p173 = por %p171, %p172
      %s175 = sadd.s32 %s174, 1
      %p178 = scmp.eq.s32.totalorder %s18, 2
      %p179 = scmp.ne.s32.totalorder %s174, %s176
      %p180 = scmp.eq.s32.totalorder %s18, 0
      %p181 = por %p179, %p180
      %p182 = scmp.ne.s32.totalorder %s174, %s176
      %p183 = scmp.eq.s32.totalorder %s23, 2
      %p184 = por %p182, %p183
      %p185 = scmp.ne.s32.totalorder %s176, %s177
      %p186 = scmp.eq.s32.totalorder %s23, 0
      %p187 = por %p185, %p186
      %p188 = scmp.ne.s32.totalorder %s176, %s177
      %p189 = scmp.eq.s32.totalorder %s24, 2
      %p190 = por %p188, %p189
      %p192 = scmp.ne.s32.totalorder %s177, %s191
      %p193 = scmp.eq.s32.totalorder %s24, 0
      %p194 = por %p192, %p193
      %s196 = sadd.s32 %s195, 1
      %p199 = scmp.eq.s32.totalorder %s18, 2
      %p200 = scmp.ne.s32.totalorder %s195, %s197
      %p201 = scmp.eq.s32.totalorder %s18, 0
      %p202 = por %p200, %p201
      %p203 = scmp.ne.s32.totalorder %s195, %s197
      %p204 = scmp.eq.s32.totalorder %s23, 2
      %p205 = por %p203, %p204
      %p206 = scmp.ne.s32.totalorder %s197, %s198
      %p207 = scmp.eq.s32.totalorder %s23, 0
      %p208 = por %p206, %p207
      %p209 = scmp.ne.s32.totalorder %s197, %s198
      %p210 = scmp.eq.s32.totalorder %s24, 2
      %p211 = por %p209, %p210
      %p213 = scmp.ne.s32.totalorder %s198, %s212
      %p214 = scmp.eq.s32.totalorder %s24, 0
      %p215 = por %p213, %p214
      %s217 = sadd.s32 %s216, 1
      %p220 = scmp.eq.s32.totalorder %s18, 2
      %p221 = scmp.ne.s32.totalorder %s216, %s218
      %p222 = scmp.eq.s32.totalorder %s18, 0
      %p223 = por %p221, %p222
      %p224 = scmp.ne.s32.totalorder %s216, %s218
      %p225 = scmp.eq.s32.totalorder %s23, 2
      %p226 = por %p224, %p225
      %p227 = scmp.ne.s32.totalorder %s218, %s219
      %p228 = scmp.eq.s32.totalorder %s23, 0
      %p229 = por %p227, %p228
      %p230 = scmp.ne.s32.totalorder %s218, %s219
      %p231 = scmp.eq.s32.totalorder %s24, 2
      %p232 = por %p230, %p231
      %p234 = scmp.ne.s32.totalorder %s219, %s233
      %p235 = scmp.eq.s32.totalorder %s24, 0
      %p236 = por %p234, %p235
      %s238 = sadd.s32 %s237, 1
      %p241 = scmp.eq.s32.totalorder %s18, 2
      %p242 = scmp.ne.s32.totalorder %s237, %s239
      %p243 = scmp.eq.s32.totalorder %s18, 0
      %p244 = por %p242, %p243
      %p245 = scmp.ne.s32.totalorder %s237, %s239
      %p246 = scmp.eq.s32.totalorder %s23, 2
      %p247 = por %p245, %p246
      %p248 = scmp.ne.s32.totalorder %s239, %s240
      %p249 = scmp.eq.s32.totalorder %s23, 0
      %p250 = por %p248, %p249
      %p251 = scmp.ne.s32.totalorder %s239, %s240
      %p252 = scmp.eq.s32.totalorder %s24, 2
      %p253 = por %p251, %p252
      %p255 = scmp.ne.s32.totalorder %s240, %s254
      %p256 = scmp.eq.s32.totalorder %s24, 0
      %p257 = por %p255, %p256
      %s258 = ssub.s32 %s26, %s33
      %p259 = scmp.eq.s32.totalorder %s258, 0
      %s261 = sadd.s32 %s260, 1
      %s262 = scalar_select %p259, %s260, %s261
      %p265 = pneg %p259
      %p266 = scmp.eq.s32.totalorder %s18, 2
      %p267 = por %p265, %p266
      %p268 = scmp.ne.s32.totalorder %s260, %s263
      %p269 = scmp.eq.s32.totalorder %s18, 0
      %p270 = por %p268, %p269
      %p271 = scmp.ne.s32.totalorder %s260, %s263
      %p272 = scmp.eq.s32.totalorder %s23, 2
      %p273 = por %p271, %p272
      %p274 = scmp.ne.s32.totalorder %s263, %s264
      %p275 = scmp.eq.s32.totalorder %s23, 0
      %p276 = por %p274, %p275
      %p277 = scmp.ne.s32.totalorder %s263, %s264
      %p278 = scmp.eq.s32.totalorder %s24, 2
      %p279 = por %p277, %p278
      %p281 = scmp.ne.s32.totalorder %s264, %s280
      %p282 = scmp.eq.s32.totalorder %s24, 0
      %p283 = por %p281, %p282
      %p284 = scmp.le.s32.totalorder 1, %s18
      %p285 = scmp.lt.s32.totalorder %s18, 4
      %p286 = pnand %p284, %p285
      %p287 = pneg %p286
      // Predicated region
      $region9: #{tpu_custom_call.1} parent=5 // pred_check
        _
      $region10: #{tpu_custom_call.1} parent=5 // pred_check_branch
        %289 = sbr.rel (%p286) target = $region12
      $region11: #{tpu_custom_call.1} parent=5 // pred_region
        %s290 = ssub.s32 %s18, 1
        // Predicated region
        $region13: #{tpu_custom_call.1} parent=11 // pred_check
          %p291 = pneg %p56
        $region14: #{tpu_custom_call.1} parent=11 // pred_check_branch
          %293 = sbr.rel (%p291) target = $region16
        $region15: #{tpu_custom_call.1} parent=11 // pred_region
          %p294 = scmp.lt.s32.totalorder %s28, 0
          %s295 = scalar_select %p294, %s28, 0
          %s296 = smul.addr %s295, 8
          %s297 = scalar_lea.vmem %s0, %s296
        $region16: #{tpu_custom_call.1} parent=11 // pred_fallthru
          _
        // Predicated region
        $region17: #{tpu_custom_call.1} parent=11 // pred_check
          %p298 = pneg %p82
        $region18: #{tpu_custom_call.1} parent=11 // pred_check_branch
          %300 = sbr.rel (%p298) target = $region20
        $region19: #{tpu_custom_call.1} parent=11 // pred_region
          %p301 = scmp.lt.s32.totalorder %s28, 0
          %s302 = scalar_select %p301, %s28, 0
          %s303 = smul.addr %s302, 8
          %s304 = scalar_lea.vmem %s1, %s303
        $region20: #{tpu_custom_call.1} parent=11 // pred_fallthru
          _
        // Predicated region
        $region21: #{tpu_custom_call.1} parent=11 // pred_check
          %p305 = pneg %p103
        $region22: #{tpu_custom_call.1} parent=11 // pred_check_branch
          %307 = sbr.rel (%p305) target = $region24
        $region23: #{tpu_custom_call.1} parent=11 // pred_region
          _
        $region24: #{tpu_custom_call.1} parent=11 // pred_fallthru
          _
        // Predicated region
        $region25: #{tpu_custom_call.1} parent=11 // pred_check
          %p308 = pneg %p124
        $region26: #{tpu_custom_call.1} parent=11 // pred_check_branch
          %310 = sbr.rel (%p308) target = $region28
        $region27: #{tpu_custom_call.1} parent=11 // pred_region
          _
        $region28: #{tpu_custom_call.1} parent=11 // pred_fallthru
          _
        // Predicated region
        $region29: #{tpu_custom_call.1} parent=11 // pred_check
          %p311 = pneg %p145
        $region30: #{tpu_custom_call.1} parent=11 // pred_check_branch
          %313 = sbr.rel (%p311) target = $region32
        $region31: #{tpu_custom_call.1} parent=11 // pred_region
          _
        $region32: #{tpu_custom_call.1} parent=11 // pred_fallthru
          _
        // Predicated region
        $region33: #{tpu_custom_call.1} parent=11 // pred_check
          %p314 = pneg %p166
        $region34: #{tpu_custom_call.1} parent=11 // pred_check_branch
          %316 = sbr.rel (%p314) target = $region36
        $region35: #{tpu_custom_call.1} parent=11 // pred_region
          %s318 = ssub.s32 4096, 4096
          %319 = vsyncadd [#allocation11], %s318
          %s320 = sshll.u32 [#allocation10], 4
          %s321 = int_to_ptr.vmem [resolvable:$true] %s320
          %326 = dma.hbm_to_vmem [thread:$0]  %s5, 4096, %s321, [#allocation11], 128, 128, 8
        $region36: #{tpu_custom_call.1} parent=11 // pred_fallthru
          _
        // Predicated region
        $region37: #{tpu_custom_call.1} parent=11 // pred_check
          %p327 = pneg %p187
        $region38: #{tpu_custom_call.1} parent=11 // pred_check_branch
          %329 = sbr.rel (%p327) target = $region40
        $region39: #{tpu_custom_call.1} parent=11 // pred_region
          _
        $region40: #{tpu_custom_call.1} parent=11 // pred_fallthru
          _
        // Predicated region
        $region41: #{tpu_custom_call.1} parent=11 // pred_check
          %p330 = pneg %p208
        $region42: #{tpu_custom_call.1} parent=11 // pred_check_branch
          %332 = sbr.rel (%p330) target = $region44
        $region43: #{tpu_custom_call.1} parent=11 // pred_region
          _
        $region44: #{tpu_custom_call.1} parent=11 // pred_fallthru
          _
        // Predicated region
        $region45: #{tpu_custom_call.1} parent=11 // pred_check
          %p333 = pneg %p229
        $region46: #{tpu_custom_call.1} parent=11 // pred_check_branch
          %335 = sbr.rel (%p333) target = $region48
        $region47: #{tpu_custom_call.1} parent=11 // pred_region
          _
        $region48: #{tpu_custom_call.1} parent=11 // pred_fallthru
          _
        // Predicated region
        $region49: #{tpu_custom_call.1} parent=11 // pred_check
          %p336 = pneg %p250
        $region50: #{tpu_custom_call.1} parent=11 // pred_check_branch
          %338 = sbr.rel (%p336) target = $region52
        $region51: #{tpu_custom_call.1} parent=11 // pred_region
          _
        $region52: #{tpu_custom_call.1} parent=11 // pred_fallthru
          _
      $region12: #{tpu_custom_call.1} parent=5 // pred_fallthru
        _
      %p339 = scmp.lt.s32.totalorder %s18, 3
      // Predicated region
      $region53: #{tpu_custom_call.1} parent=5 // pred_check
        %p340 = pneg %p339
      $region54: #{tpu_custom_call.1} parent=5 // pred_check_branch
        %342 = sbr.rel (%p340) target = $region56
      $region55: #{tpu_custom_call.1} parent=5 // pred_region
        _
      $region56: #{tpu_custom_call.1} parent=5 // pred_fallthru
        _
      %p343 = scmp.le.s32.totalorder 1, %s18
      %p344 = scmp.lt.s32.totalorder %s18, 4
      %p345 = pnand %p343, %p344
      %p346 = pneg %p345
      // Predicated region
      $region57: #{tpu_custom_call.1} parent=5 // pred_check
        _
      $region58: #{tpu_custom_call.1} parent=5 // pred_check_branch
        %348 = sbr.rel (%p345) target = $region60
      $region59: #{tpu_custom_call.1} parent=5 // pred_region
        %s349 = ssub.s32 %s18, 1
        // Predicated region
        $region61: #{tpu_custom_call.1} parent=59 // pred_check
          %p350 = pneg %p166
        $region62: #{tpu_custom_call.1} parent=59 // pred_check_branch
          %352 = sbr.rel (%p350) target = $region64
        $region63: #{tpu_custom_call.1} parent=59 // pred_region
          %353 = dma.done [#allocation11], 4096
        $region64: #{tpu_custom_call.1} parent=59 // pred_fallthru
          _
        %p354 = scmp.lt.s32.totalorder %s28, 0
        %s355 = scalar_select %p354, %s28, 0
        %s356 = smul.addr %s355, 8
        %s357 = scalar_lea.vmem %s0, %s356
        %p358 = pneg %p56
        %p359 = pneg %p53
        %p360 = scmp.lt.s32.totalorder %s28, 0
        %s361 = scalar_select %p360, %s28, 0
        %s362 = smul.addr %s361, 8
        %s363 = scalar_lea.vmem %s1, %s362
        %p364 = pneg %p82
        %p365 = pneg %p79
        %p366 = pneg %p103
        %p367 = pneg %p100
        %p368 = pneg %p124
        %p369 = pneg %p121
        %p370 = pneg %p145
        %p371 = pneg %p142
        %p372 = pneg %p166
        %p373 = pneg %p163
        %p374 = pneg %p187
        %p375 = pneg %p184
        %p376 = pneg %p208
        %p377 = pneg %p205
        %p378 = pneg %p229
        %p379 = pneg %p226
        %p380 = pneg %p250
        %p381 = pneg %p247
        %p382 = pneg %p276
        %p383 = pneg %p273
        %p384 = scmp.lt.s32.totalorder %s28, 0
        %s385 = scalar_select %p384, %s28, 0
        %s386 = smul.addr %s385, 8
        %s387 = scalar_lea.vmem %s0, %s386
        %p388 = scmp.lt.s32.totalorder %s28, 0
        %s389 = scalar_select %p388, %s28, 0
        %s390 = smul.addr %s389, 8
        %s391 = scalar_lea.vmem %s1, %s390
        %v393 = vld [vmem:[%s387] sm:$0xff]
        %v394 = vld [vmem:[%s391] sm:$0xff]
        %v395 = vadd.f32 %v393, %v394
        %v396 = vpack.c.bf16 %v395, %v395
        %v397 = vld [vmem:[%s2] sm:$0xff]
        %v398 = vld [vmem:[%s2 + $0x8] sm:$0xff]
        %v399 = vld [vmem:[%s2 + $0x10] sm:$0xff]
        %v400 = vld [vmem:[%s2 + $0x18] sm:$0xff]
        %v405 = vunpack.c.l.b16 %v397
        %v406 = vunpack.c.h.b16 %v397
        %v407 = vunpack.c.l.b16 %v398
        %v408 = vunpack.c.h.b16 %v398
        %v409 = vunpack.c.l.b16 %v399
        %v410 = vunpack.c.h.b16 %v399
        %v411 = vunpack.c.l.b16 %v400
        %v412 = vunpack.c.h.b16 %v400
        %v413 = vpack.c.b16 %v407, %v405
        %v414 = vpack.c.b16 %v408, %v406
        %v415 = vpack.c.b16 %v411, %v409
        %v416 = vpack.c.b16 %v412, %v410
        %vm421 = vcmask 261120
        %v423 = vsel %vm421, %v396, 0
        %425 = vmatprep.subr.bf16.mxu0 %v414
        %426 = vmatpush1.bf16.msra.mxu0 %v413
        %427 = vmatprep.subr.bf16.mxu0 %v416
        %428 = vmatpush1.bf16.msra.mxu0 %v415
        %429 = vmatprep.subr.bf16.mxu0 0
        %430 = vmatpush1.bf16.msra.mxu0 0
        %431 = vmatprep.subr.bf16.mxu0 0
        %432 = vmatpush1.bf16.msra.mxu0 0
        %433 = vmatprep.subr.bf16.mxu0 0
        %434 = vmatpush1.bf16.msra.mxu0 0
        %435 = vmatprep.subr.bf16.mxu0 0
        %436 = vmatpush1.bf16.msra.mxu0 0
        %437 = vmatprep.subr.bf16.mxu0 0
        %438 = vmatpush1.bf16.msra.mxu0 0
        %439 = vmatprep.subr.bf16.mxu0 0
        %440 = vmatpush1.bf16.msra.mxu0 0
        %441 = vmatprep.subr.bf16.mxu0 0
        %442 = vmatpush1.bf16.msra.mxu0 0
        %443 = vmatprep.subr.bf16.mxu0 0
        %444 = vmatpush1.bf16.msra.mxu0 0
        %445 = vmatprep.subr.bf16.mxu0 0
        %446 = vmatpush1.bf16.msra.mxu0 0
        %447 = vmatprep.subr.bf16.mxu0 0
        %448 = vmatpush1.bf16.msra.mxu0 0
        %449 = vmatprep.subr.bf16.mxu0 0
        %450 = vmatpush1.bf16.msra.mxu0 0
        %451 = vmatprep.subr.bf16.mxu0 0
        %452 = vmatpush1.bf16.msra.mxu0 0
        %453 = vmatprep.subr.bf16.mxu0 0
        %454 = vmatpush1.bf16.msra.mxu0 0
        %455 = vmatprep.subr.bf16.mxu0 0
        %456 = vmatpush1.bf16.msra.mxu0 0
        %457 = vmatprep.mubr.bf16.mxu0 0
        %458 = vmatmul.mubr.bf16.gmra.mrb[0].mxu0 %v423
        %v459 = vpop.f32.mrb[0].mxu0
        %v460 = vadd.f32 0.0, %v459
        %v461 = vpop.f32.mrb[0].mxu0
        %v462 = vadd.f32 0.0, %v461
        %v463 = vpop.f32.mrb[0].mxu0
        %v464 = vpop.f32.mrb[0].mxu0
        %465 = vdwg.mxu0
        %p466 = scmp.eq.s32.totalorder %s27, 0
        // Predicated region
        $region65: #{tpu_custom_call.1} parent=59 // pred_check
          %p467 = pneg %p466
        $region66: #{tpu_custom_call.1} parent=59 // pred_check_branch
          %469 = sbr.rel (%p467) target = $region68
        $region67: #{tpu_custom_call.1} parent=59 // pred_region
          %p470 = scmp.eq.s32.totalorder %s28, 0
          // Predicated region
          $region69: #{tpu_custom_call.1} parent=67 // pred_check
            %p471 = pneg %p470
          $region70: #{tpu_custom_call.1} parent=67 // pred_check_branch
            %473 = sbr.rel (%p471) target = $region72
          $region71: #{tpu_custom_call.1} parent=67 // pred_region
            %v474 = vlaneseq
            %vm475 = vcmp.ge.s32.totalorder %v474, 0
            %vm476 = vcmp.lt.s32.totalorder %v474, 256
            %vm477 = vmand %vm475, %vm476
            %478 = vst.msk [vmem:[#allocation2] sm:$0x3] %vm477, 0.0
            %479 = vst.msk [vmem:[#allocation3] sm:$0x3] %vm477, 0.0
          $region72: #{tpu_custom_call.1} parent=67 // pred_fallthru
            _
          %v480 = vld [vmem:[#allocation2] sm:$0x3]
          %v481 = vrot.slane %v460, 4
          %v482 = vadd.f32 %v460, %v481
          %v483 = vrot.slane %v482, 2
          %v484 = vadd.f32 %v482, %v483
          %v485 = vrot.slane %v484, 1
          %v486 = vadd.f32 %v484, %v485
          %v487 = vrot.slane %v462, 4
          %v488 = vadd.f32 %v462, %v487
          %v489 = vrot.slane %v488, 2
          %v490 = vadd.f32 %v488, %v489
          %v491 = vrot.slane %v490, 1
          %v492 = vadd.f32 %v490, %v491
          %v495 = vcombine.low %v486, %v492
          %v497 = vunpack.c.l.s4 1966171168
          %v498 = vunpack.c.0.s8 %v497
          %v499 = vlaneseq
          %v500 = vshrl.u32 %v499, 7
          %v501 = vsub.s32 %v498, %v500
          %v502 = vrot.slane %v495, %v501
          %v504 = vunpack.c.l.s4 1966171168
          %v505 = vunpack.c.0.s8 %v504
          %v506 = vlaneseq
          %v507 = vshrl.u32 %v506, 7
          %v508 = vsub.s32 %v505, %v507
          %v509 = vrot.slane %v502, %v508
          %v511 = vadd.f32 %v480, %v509
          %v512 = vlaneseq
          %vm513 = vcmp.ge.s32.totalorder %v512, 0
          %vm514 = vcmp.lt.s32.totalorder %v512, 256
          %vm515 = vmand %vm513, %vm514
          %516 = vst.msk [vmem:[#allocation2] sm:$0x3] %vm515, %v511
          %v517 = vld [vmem:[#allocation3] sm:$0x3]
          %v518 = vmul.f32 %v460, %v460
          %v519 = vmul.f32 %v462, %v462
          %v520 = vrot.slane %v518, 4
          %v521 = vadd.f32 %v518, %v520
          %v522 = vrot.slane %v521, 2
          %v523 = vadd.f32 %v521, %v522
          %v524 = vrot.slane %v523, 1
          %v525 = vadd.f32 %v523, %v524
          %v526 = vrot.slane %v519, 4
          %v527 = vadd.f32 %v519, %v526
          %v528 = vrot.slane %v527, 2
          %v529 = vadd.f32 %v527, %v528
          %v530 = vrot.slane %v529, 1
          %v531 = vadd.f32 %v529, %v530
          %v534 = vcombine.low %v525, %v531
          %v536 = vunpack.c.l.s4 1966171168
          %v537 = vunpack.c.0.s8 %v536
          %v538 = vlaneseq
          %v539 = vshrl.u32 %v538, 7
          %v540 = vsub.s32 %v537, %v539
          %v541 = vrot.slane %v534, %v540
          %v543 = vunpack.c.l.s4 1966171168
          %v544 = vunpack.c.0.s8 %v543
          %v545 = vlaneseq
          %v546 = vshrl.u32 %v545, 7
          %v547 = vsub.s32 %v544, %v546
          %v548 = vrot.slane %v541, %v547
          %v550 = vadd.f32 %v517, %v548
          %551 = vst.msk [vmem:[#allocation3] sm:$0x3] %vm515, %v550
        $region68: #{tpu_custom_call.1} parent=59 // pred_fallthru
          _
        %p552 = scmp.gt.s32.totalorder %s27, 0
        // Predicated region
        $region73: #{tpu_custom_call.1} parent=59 // pred_check
          %p553 = pneg %p552
        $region74: #{tpu_custom_call.1} parent=59 // pred_check_branch
          %555 = sbr.rel (%p553) target = $region76
        $region75: #{tpu_custom_call.1} parent=59 // pred_region
          %p556 = scmp.eq.s32.totalorder %s27, 1
          %p557 = scmp.eq.s32.totalorder %s28, 0
          %p558 = pnand %p556, %p557
          %p559 = pneg %p558
          // Predicated region
          $region77: #{tpu_custom_call.1} parent=75 // pred_check
            _
          $region78: #{tpu_custom_call.1} parent=75 // pred_check_branch
            %561 = sbr.rel (%p558) target = $region80
          $region79: #{tpu_custom_call.1} parent=75 // pred_region
            %v562 = vld [vmem:[#allocation2] sm:$0x3]
            %v563 = vmul.f32 %v562, 0.125
            %v564 = vld [vmem:[#allocation3] sm:$0x3]
            %v565 = vmul.f32 %v564, 0.125
            %v566 = vmul.f32 %v563, %v563
            %v567 = vsub.f32 %v565, %v566
            %v568 = vmax.f32 %v567, 0.0
            %v569 = vld [vmem:[%s3] sm:$0x3]
            %v570 = vadd.f32 %v568, 1e-05
            %v571 = vrsqrt.pop %v570
            %v572 = vmul.f32 %v569, %v571
            %v573 = vlaneseq
            %vm574 = vcmp.ge.s32.totalorder %v573, 0
            %vm575 = vcmp.lt.s32.totalorder %v573, 256
            %vm576 = vmand %vm574, %vm575
            %577 = vst.msk [vmem:[#allocation6] sm:$0x3] %vm576, %v572
            %v578 = vld [vmem:[%s4] sm:$0x3]
            %v579 = vmul.f32 %v563, %v572
            %v580 = vsub.f32 %v578, %v579
            %581 = vst.msk [vmem:[#allocation7] sm:$0x3] %vm576, %v580
          $region80: #{tpu_custom_call.1} parent=75 // pred_fallthru
            _
          %v582 = vld [vmem:[#allocation6] sm:$0x3]
          %v584 = vlaneseq
          %v585 = vshrl.u32 %v584, 7
          %v586 = vsub.s32 0, %v585
          %v587 = vrot.slane %v582, %v586
          %v588 = vlaneseq
          %v589 = vshrl.u32 %v588, 7
          %v590 = vsub.s32 1, %v589
          %v591 = vrot.slane %v582, %v590
          %v594 = vmul.f32 %v460, %v587
          %v595 = vmul.f32 %v462, %v591
          %v596 = vld [vmem:[#allocation7] sm:$0x3]
          %v598 = vlaneseq
          %v599 = vshrl.u32 %v598, 7
          %v600 = vsub.s32 0, %v599
          %v601 = vrot.slane %v596, %v600
          %v602 = vlaneseq
          %v603 = vshrl.u32 %v602, 7
          %v604 = vsub.s32 1, %v603
          %v605 = vrot.slane %v596, %v604
          %v608 = vadd.f32 %v594, %v601
          %v609 = vadd.f32 %v595, %v605
          %v610 = vmax.f32 %v608, 0.0
          %v611 = vmax.f32 %v609, 0.0
          %v612 = vpack.c.bf16 %v610, %v610
          %v613 = vpack.c.bf16 %v611, %v611
          %v614 = vld [vmem:[#allocation10] sm:$0xff]
          %v615 = vld [vmem:[#allocation10 + $0x8] sm:$0xff]
          %v616 = vld [vmem:[#allocation10 + $0x10] sm:$0xff]
          %v617 = vld [vmem:[#allocation10 + $0x18] sm:$0xff]
          %v618 = vld [vmem:[#allocation10 + $0x20] sm:$0xff]
          %v619 = vld [vmem:[#allocation10 + $0x28] sm:$0xff]
          %v620 = vld [vmem:[#allocation10 + $0x30] sm:$0xff]
          %v621 = vld [vmem:[#allocation10 + $0x38] sm:$0xff]
          %v622 = vld [vmem:[#allocation10 + $0x40] sm:$0xff]
          %v623 = vld [vmem:[#allocation10 + $0x48] sm:$0xff]
          %v624 = vld [vmem:[#allocation10 + $0x50] sm:$0xff]
          %v625 = vld [vmem:[#allocation10 + $0x58] sm:$0xff]
          %v626 = vld [vmem:[#allocation10 + $0x60] sm:$0xff]
          %v627 = vld [vmem:[#allocation10 + $0x68] sm:$0xff]
          %v628 = vld [vmem:[#allocation10 + $0x70] sm:$0xff]
          %v629 = vld [vmem:[#allocation10 + $0x78] sm:$0xff]
          %v630 = vld [vmem:[#allocation10 + $0x80] sm:$0xff]
          %v631 = vld [vmem:[#allocation10 + $0x88] sm:$0xff]
          %v632 = vld [vmem:[#allocation10 + $0x90] sm:$0xff]
          %v633 = vld [vmem:[#allocation10 + $0x98] sm:$0xff]
          %v634 = vld [vmem:[#allocation10 + $0xa0] sm:$0xff]
          %v635 = vld [vmem:[#allocation10 + $0xa8] sm:$0xff]
          %v636 = vld [vmem:[#allocation10 + $0xb0] sm:$0xff]
          %v637 = vld [vmem:[#allocation10 + $0xb8] sm:$0xff]
          %v638 = vld [vmem:[#allocation10 + $0xc0] sm:$0xff]
          %v639 = vld [vmem:[#allocation10 + $0xc8] sm:$0xff]
          %v640 = vld [vmem:[#allocation10 + $0xd0] sm:$0xff]
          %v641 = vld [vmem:[#allocation10 + $0xd8] sm:$0xff]
          %v642 = vld [vmem:[#allocation10 + $0xe0] sm:$0xff]
          %v643 = vld [vmem:[#allocation10 + $0xe8] sm:$0xff]
          %v644 = vld [vmem:[#allocation10 + $0xf0] sm:$0xff]
          %v645 = vld [vmem:[#allocation10 + $0xf8] sm:$0xff]
          %v678 = vunpack.c.l.b16 %v614
          %v679 = vunpack.c.h.b16 %v614
          %v680 = vunpack.c.l.b16 %v615
          %v681 = vunpack.c.h.b16 %v615
          %v682 = vunpack.c.l.b16 %v616
          %v683 = vunpack.c.h.b16 %v616
          %v684 = vunpack.c.l.b16 %v617
          %v685 = vunpack.c.h.b16 %v617
          %v686 = vunpack.c.l.b16 %v618
          %v687 = vunpack.c.h.b16 %v618
          %v688 = vunpack.c.l.b16 %v619
          %v689 = vunpack.c.h.b16 %v619
          %v690 = vunpack.c.l.b16 %v620
          %v691 = vunpack.c.h.b16 %v620
          %v692 = vunpack.c.l.b16 %v621
          %v693 = vunpack.c.h.b16 %v621
          %v694 = vunpack.c.l.b16 %v622
          %v695 = vunpack.c.h.b16 %v622
          %v696 = vunpack.c.l.b16 %v623
          %v697 = vunpack.c.h.b16 %v623
          %v698 = vunpack.c.l.b16 %v624
          %v699 = vunpack.c.h.b16 %v624
          %v700 = vunpack.c.l.b16 %v625
          %v701 = vunpack.c.h.b16 %v625
          %v702 = vunpack.c.l.b16 %v626
          %v703 = vunpack.c.h.b16 %v626
          %v704 = vunpack.c.l.b16 %v627
          %v705 = vunpack.c.h.b16 %v627
          %v706 = vunpack.c.l.b16 %v628
          %v707 = vunpack.c.h.b16 %v628
          %v708 = vunpack.c.l.b16 %v629
          %v709 = vunpack.c.h.b16 %v629
          %v710 = vunpack.c.l.b16 %v630
          %v711 = vunpack.c.h.b16 %v630
          %v712 = vunpack.c.l.b16 %v631
          %v713 = vunpack.c.h.b16 %v631
          %v714 = vunpack.c.l.b16 %v632
          %v715 = vunpack.c.h.b16 %v632
          %v716 = vunpack.c.l.b16 %v633
          %v717 = vunpack.c.h.b16 %v633
          %v718 = vunpack.c.l.b16 %v634
          %v719 = vunpack.c.h.b16 %v634
          %v720 = vunpack.c.l.b16 %v635
          %v721 = vunpack.c.h.b16 %v635
          %v722 = vunpack.c.l.b16 %v636
          %v723 = vunpack.c.h.b16 %v636
          %v724 = vunpack.c.l.b16 %v637
          %v725 = vunpack.c.h.b16 %v637
          %v726 = vunpack.c.l.b16 %v638
          %v727 = vunpack.c.h.b16 %v638
          %v728 = vunpack.c.l.b16 %v639
          %v729 = vunpack.c.h.b16 %v639
          %v730 = vunpack.c.l.b16 %v640
          %v731 = vunpack.c.h.b16 %v640
          %v732 = vunpack.c.l.b16 %v641
          %v733 = vunpack.c.h.b16 %v641
          %v734 = vunpack.c.l.b16 %v642
          %v735 = vunpack.c.h.b16 %v642
          %v736 = vunpack.c.l.b16 %v643
          %v737 = vunpack.c.h.b16 %v643
          %v738 = vunpack.c.l.b16 %v644
          %v739 = vunpack.c.h.b16 %v644
          %v740 = vunpack.c.l.b16 %v645
          %v741 = vunpack.c.h.b16 %v645
          %v742 = vpack.c.b16 %v680, %v678
          %v743 = vpack.c.b16 %v681, %v679
          %v744 = vpack.c.b16 %v684, %v682
          %v745 = vpack.c.b16 %v685, %v683
          %v746 = vpack.c.b16 %v688, %v686
          %v747 = vpack.c.b16 %v689, %v687
          %v748 = vpack.c.b16 %v692, %v690
          %v749 = vpack.c.b16 %v693, %v691
          %v750 = vpack.c.b16 %v696, %v694
          %v751 = vpack.c.b16 %v697, %v695
          %v752 = vpack.c.b16 %v700, %v698
          %v753 = vpack.c.b16 %v701, %v699
          %v754 = vpack.c.b16 %v704, %v702
          %v755 = vpack.c.b16 %v705, %v703
          %v756 = vpack.c.b16 %v708, %v706
          %v757 = vpack.c.b16 %v709, %v707
          %v758 = vpack.c.b16 %v712, %v710
          %v759 = vpack.c.b16 %v713, %v711
          %v760 = vpack.c.b16 %v716, %v714
          %v761 = vpack.c.b16 %v717, %v715
          %v762 = vpack.c.b16 %v720, %v718
          %v763 = vpack.c.b16 %v721, %v719
          %v764 = vpack.c.b16 %v724, %v722
          %v765 = vpack.c.b16 %v725, %v723
          %v766 = vpack.c.b16 %v728, %v726
          %v767 = vpack.c.b16 %v729, %v727
          %v768 = vpack.c.b16 %v732, %v730
          %v769 = vpack.c.b16 %v733, %v731
          %v770 = vpack.c.b16 %v736, %v734
          %v771 = vpack.c.b16 %v737, %v735
          %v772 = vpack.c.b16 %v740, %v738
          %v773 = vpack.c.b16 %v741, %v739
          %806 = vmatprep.subr.bf16.mxu0 %v743
          %807 = vmatpush1.bf16.msra.mxu0 %v742
          %808 = vmatprep.subr.bf16.mxu0 %v745
          %809 = vmatpush1.bf16.msra.mxu0 %v744
          %810 = vmatprep.subr.bf16.mxu0 %v747
          %811 = vmatpush1.bf16.msra.mxu0 %v746
          %812 = vmatprep.subr.bf16.mxu0 %v749
          %813 = vmatpush1.bf16.msra.mxu0 %v748
          %814 = vmatprep.subr.bf16.mxu0 %v751
          %815 = vmatpush1.bf16.msra.mxu0 %v750
          %816 = vmatprep.subr.bf16.mxu0 %v753
          %817 = vmatpush1.bf16.msra.mxu0 %v752
          %818 = vmatprep.subr.bf16.mxu0 %v755
          %819 = vmatpush1.bf16.msra.mxu0 %v754
          %820 = vmatprep.subr.bf16.mxu0 %v757
          %821 = vmatpush1.bf16.msra.mxu0 %v756
          %822 = vmatprep.subr.bf16.mxu0 %v759
          %823 = vmatpush1.bf16.msra.mxu0 %v758
          %824 = vmatprep.subr.bf16.mxu0 %v761
          %825 = vmatpush1.bf16.msra.mxu0 %v760
          %826 = vmatprep.subr.bf16.mxu0 %v763
          %827 = vmatpush1.bf16.msra.mxu0 %v762
          %828 = vmatprep.subr.bf16.mxu0 %v765
          %829 = vmatpush1.bf16.msra.mxu0 %v764
          %830 = vmatprep.subr.bf16.mxu0 %v767
          %831 = vmatpush1.bf16.msra.mxu0 %v766
          %832 = vmatprep.subr.bf16.mxu0 %v769
          %833 = vmatpush1.bf16.msra.mxu0 %v768
          %834 = vmatprep.subr.bf16.mxu0 %v771
          %835 = vmatpush1.bf16.msra.mxu0 %v770
          %836 = vmatprep.subr.bf16.mxu0 %v773
          %837 = vmatpush1.bf16.msra.mxu0 %v772
          %838 = vmatprep.mubr.bf16.mxu0 %v613
          %839 = vmatmul.mubr.bf16.gmra.mrb[0].mxu0 %v612
          %v840 = vpop.f32.mrb[0].mxu0
          %v841 = vadd.f32 0.0, %v840
          %v842 = vpop.f32.mrb[0].mxu0
          %v843 = vadd.f32 0.0, %v842
          %v844 = vpop.f32.mrb[0].mxu0
          %v845 = vpop.f32.mrb[0].mxu0
          %846 = vdwg.mxu0
          // Predicated region
          $region81: #{tpu_custom_call.1} parent=75 // pred_check
            %p847 = pneg %p556
          $region82: #{tpu_custom_call.1} parent=75 // pred_check_branch
            %849 = sbr.rel (%p847) target = $region84
          $region83: #{tpu_custom_call.1} parent=75 // pred_region
            // Predicated region
            $region85: #{tpu_custom_call.1} parent=83 // pred_check
              %p850 = pneg %p557
            $region86: #{tpu_custom_call.1} parent=83 // pred_check_branch
              %852 = sbr.rel (%p850) target = $region88
            $region87: #{tpu_custom_call.1} parent=83 // pred_region
              %v853 = vlaneseq
              %vm854 = vcmp.ge.s32.totalorder %v853, 0
              %vm855 = vcmp.lt.s32.totalorder %v853, 256
              %vm856 = vmand %vm854, %vm855
              %857 = vst.msk [vmem:[#allocation4] sm:$0x3] %vm856, 0.0
              %858 = vst.msk [vmem:[#allocation5] sm:$0x3] %vm856, 0.0
            $region88: #{tpu_custom_call.1} parent=83 // pred_fallthru
              _
            %v859 = vld [vmem:[#allocation4] sm:$0x3]
            %v860 = vrot.slane %v841, 4
            %v861 = vadd.f32 %v841, %v860
            %v862 = vrot.slane %v861, 2
            %v863 = vadd.f32 %v861, %v862
            %v864 = vrot.slane %v863, 1
            %v865 = vadd.f32 %v863, %v864
            %v866 = vrot.slane %v843, 4
            %v867 = vadd.f32 %v843, %v866
            %v868 = vrot.slane %v867, 2
            %v869 = vadd.f32 %v867, %v868
            %v870 = vrot.slane %v869, 1
            %v871 = vadd.f32 %v869, %v870
            %v874 = vcombine.low %v865, %v871
            %v876 = vunpack.c.l.s4 1966171168
            %v877 = vunpack.c.0.s8 %v876
            %v878 = vlaneseq
            %v879 = vshrl.u32 %v878, 7
            %v880 = vsub.s32 %v877, %v879
            %v881 = vrot.slane %v874, %v880
            %v883 = vunpack.c.l.s4 1966171168
            %v884 = vunpack.c.0.s8 %v883
            %v885 = vlaneseq
            %v886 = vshrl.u32 %v885, 7
            %v887 = vsub.s32 %v884, %v886
            %v888 = vrot.slane %v881, %v887
            %v890 = vadd.f32 %v859, %v888
            %v891 = vlaneseq
            %vm892 = vcmp.ge.s32.totalorder %v891, 0
            %vm893 = vcmp.lt.s32.totalorder %v891, 256
            %vm894 = vmand %vm892, %vm893
            %895 = vst.msk [vmem:[#allocation4] sm:$0x3] %vm894, %v890
            %v896 = vld [vmem:[#allocation5] sm:$0x3]
            %v897 = vmul.f32 %v841, %v841
            %v898 = vmul.f32 %v843, %v843
            %v899 = vrot.slane %v897, 4
            %v900 = vadd.f32 %v897, %v899
            %v901 = vrot.slane %v900, 2
            %v902 = vadd.f32 %v900, %v901
            %v903 = vrot.slane %v902, 1
            %v904 = vadd.f32 %v902, %v903
            %v905 = vrot.slane %v898, 4
            %v906 = vadd.f32 %v898, %v905
            %v907 = vrot.slane %v906, 2
            %v908 = vadd.f32 %v906, %v907
            %v909 = vrot.slane %v908, 1
            %v910 = vadd.f32 %v908, %v909
            %v913 = vcombine.low %v904, %v910
            %v915 = vunpack.c.l.s4 1966171168
            %v916 = vunpack.c.0.s8 %v915
            %v917 = vlaneseq
            %v918 = vshrl.u32 %v917, 7
            %v919 = vsub.s32 %v916, %v918
            %v920 = vrot.slane %v913, %v919
            %v922 = vunpack.c.l.s4 1966171168
            %v923 = vunpack.c.0.s8 %v922
            %v924 = vlaneseq
            %v925 = vshrl.u32 %v924, 7
            %v926 = vsub.s32 %v923, %v925
            %v927 = vrot.slane %v920, %v926
            %v929 = vadd.f32 %v896, %v927
            %930 = vst.msk [vmem:[#allocation5] sm:$0x3] %vm894, %v929
          $region84: #{tpu_custom_call.1} parent=75 // pred_fallthru
            _
          %p931 = scmp.eq.s32.totalorder %s27, 2
          // Predicated region
          $region89: #{tpu_custom_call.1} parent=75 // pred_check
            %p932 = pneg %p931
          $region90: #{tpu_custom_call.1} parent=75 // pred_check_branch
            %934 = sbr.rel (%p932) target = $region92
          $region91: #{tpu_custom_call.1} parent=75 // pred_region
            // Predicated region
            $region93: #{tpu_custom_call.1} parent=91 // pred_check
              %p935 = pneg %p557
            $region94: #{tpu_custom_call.1} parent=91 // pred_check_branch
              %937 = sbr.rel (%p935) target = $region96
            $region95: #{tpu_custom_call.1} parent=91 // pred_region
              %v938 = vld [vmem:[#allocation4] sm:$0x3]
              %v939 = vmul.f32 %v938, 0.125
              %v940 = vld [vmem:[#allocation5] sm:$0x3]
              %v941 = vmul.f32 %v940, 0.125
              %v942 = vmul.f32 %v939, %v939
              %v943 = vsub.f32 %v941, %v942
              %v944 = vmax.f32 %v943, 0.0
              %v945 = vld [vmem:[%s6] sm:$0x3]
              %v946 = vadd.f32 %v944, 1e-05
              %v947 = vrsqrt.pop %v946
              %v948 = vmul.f32 %v945, %v947
              %v949 = vlaneseq
              %vm950 = vcmp.ge.s32.totalorder %v949, 0
              %vm951 = vcmp.lt.s32.totalorder %v949, 256
              %vm952 = vmand %vm950, %vm951
              %953 = vst.msk [vmem:[#allocation8] sm:$0x3] %vm952, %v948
              %v954 = vld [vmem:[%s7] sm:$0x3]
              %v955 = vmul.f32 %v939, %v948
              %v956 = vsub.f32 %v954, %v955
              %957 = vst.msk [vmem:[#allocation9] sm:$0x3] %vm952, %v956
            $region96: #{tpu_custom_call.1} parent=91 // pred_fallthru
              _
            %v958 = vld [vmem:[#allocation8] sm:$0x3]
            %v960 = vlaneseq
            %v961 = vshrl.u32 %v960, 7
            %v962 = vsub.s32 0, %v961
            %v963 = vrot.slane %v958, %v962
            %v964 = vlaneseq
            %v965 = vshrl.u32 %v964, 7
            %v966 = vsub.s32 1, %v965
            %v967 = vrot.slane %v958, %v966
            %v970 = vmul.f32 %v841, %v963
            %v971 = vmul.f32 %v843, %v967
            %v972 = vld [vmem:[#allocation9] sm:$0x3]
            %v974 = vlaneseq
            %v975 = vshrl.u32 %v974, 7
            %v976 = vsub.s32 0, %v975
            %v977 = vrot.slane %v972, %v976
            %v978 = vlaneseq
            %v979 = vshrl.u32 %v978, 7
            %v980 = vsub.s32 1, %v979
            %v981 = vrot.slane %v972, %v980
            %v984 = vadd.f32 %v970, %v977
            %v985 = vadd.f32 %v971, %v981
            %v986 = vmax.f32 %v984, 0.0
            %v987 = vmax.f32 %v985, 0.0
            %v988 = vpack.c.bf16 %v986, %v986
            %v989 = vpack.c.bf16 %v987, %v987
            %v990 = vld [vmem:[%s8] sm:$0xf]
            %v991 = vld [vmem:[%s8 + $0x4] sm:$0xf]
            %v992 = vld [vmem:[%s8 + $0x8] sm:$0xf]
            %v993 = vld [vmem:[%s8 + $0xc] sm:$0xf]
            %v994 = vld [vmem:[%s8 + $0x10] sm:$0xf]
            %v995 = vld [vmem:[%s8 + $0x14] sm:$0xf]
            %v996 = vld [vmem:[%s8 + $0x18] sm:$0xf]
            %v997 = vld [vmem:[%s8 + $0x1c] sm:$0xf]
            %v998 = vld [vmem:[%s8 + $0x20] sm:$0xf]
            %v999 = vld [vmem:[%s8 + $0x24] sm:$0xf]
            %v1000 = vld [vmem:[%s8 + $0x28] sm:$0xf]
            %v1001 = vld [vmem:[%s8 + $0x2c] sm:$0xf]
            %v1002 = vld [vmem:[%s8 + $0x30] sm:$0xf]
            %v1003 = vld [vmem:[%s8 + $0x34] sm:$0xf]
            %v1004 = vld [vmem:[%s8 + $0x38] sm:$0xf]
            %v1005 = vld [vmem:[%s8 + $0x3c] sm:$0xf]
            %v1006 = vld [vmem:[%s8 + $0x40] sm:$0xf]
            %v1007 = vld [vmem:[%s8 + $0x44] sm:$0xf]
            %v1008 = vld [vmem:[%s8 + $0x48] sm:$0xf]
            %v1009 = vld [vmem:[%s8 + $0x4c] sm:$0xf]
            %v1010 = vld [vmem:[%s8 + $0x50] sm:$0xf]
            %v1011 = vld [vmem:[%s8 + $0x54] sm:$0xf]
            %v1012 = vld [vmem:[%s8 + $0x58] sm:$0xf]
            %v1013 = vld [vmem:[%s8 + $0x5c] sm:$0xf]
            %v1014 = vld [vmem:[%s8 + $0x60] sm:$0xf]
            %v1015 = vld [vmem:[%s8 + $0x64] sm:$0xf]
            %v1016 = vld [vmem:[%s8 + $0x68] sm:$0xf]
            %v1017 = vld [vmem:[%s8 + $0x6c] sm:$0xf]
            %v1018 = vld [vmem:[%s8 + $0x70] sm:$0xf]
            %v1019 = vld [vmem:[%s8 + $0x74] sm:$0xf]
            %v1020 = vld [vmem:[%s8 + $0x78] sm:$0xf]
            %v1021 = vld [vmem:[%s8 + $0x7c] sm:$0xf]
            %v1022 = vld [vmem:[%s9] sm:$0x1]
            %v1024 = vlaneseq
            %v1025 = vshrl.u32 %v1024, 7
            %v1026 = vsub.s32 0, %v1025
            %v1027 = vrot.slane %v1022, %v1026
            %v1061 = vunpack.c.l.b16 %v990
            %v1062 = vunpack.c.l.b16 %v991
            %v1063 = vunpack.c.l.b16 %v992
            %v1064 = vunpack.c.l.b16 %v993
            %v1065 = vunpack.c.l.b16 %v994
            %v1066 = vunpack.c.l.b16 %v995
            %v1067 = vunpack.c.l.b16 %v996
            %v1068 = vunpack.c.l.b16 %v997
            %v1069 = vunpack.c.l.b16 %v998
            %v1070 = vunpack.c.l.b16 %v999
            %v1071 = vunpack.c.l.b16 %v1000
            %v1072 = vunpack.c.l.b16 %v1001
            %v1073 = vunpack.c.l.b16 %v1002
            %v1074 = vunpack.c.l.b16 %v1003
            %v1075 = vunpack.c.l.b16 %v1004
            %v1076 = vunpack.c.l.b16 %v1005
            %v1077 = vunpack.c.l.b16 %v1006
            %v1078 = vunpack.c.l.b16 %v1007
            %v1079 = vunpack.c.l.b16 %v1008
            %v1080 = vunpack.c.l.b16 %v1009
            %v1081 = vunpack.c.l.b16 %v1010
            %v1082 = vunpack.c.l.b16 %v1011
            %v1083 = vunpack.c.l.b16 %v1012
            %v1084 = vunpack.c.l.b16 %v1013
            %v1085 = vunpack.c.l.b16 %v1014
            %v1086 = vunpack.c.l.b16 %v1015
            %v1087 = vunpack.c.l.b16 %v1016
            %v1088 = vunpack.c.l.b16 %v1017
            %v1089 = vunpack.c.l.b16 %v1018
            %v1090 = vunpack.c.l.b16 %v1019
            %v1091 = vunpack.c.l.b16 %v1020
            %v1092 = vunpack.c.l.b16 %v1021
            %v1093 = vpack.c.b16 %v1062, %v1061
            %v1094 = vpack.c.b16 %v1064, %v1063
            %v1095 = vpack.c.b16 %v1066, %v1065
            %v1096 = vpack.c.b16 %v1068, %v1067
            %v1097 = vpack.c.b16 %v1070, %v1069
            %v1098 = vpack.c.b16 %v1072, %v1071
            %v1099 = vpack.c.b16 %v1074, %v1073
            %v1100 = vpack.c.b16 %v1076, %v1075
            %v1101 = vpack.c.b16 %v1078, %v1077
            %v1102 = vpack.c.b16 %v1080, %v1079
            %v1103 = vpack.c.b16 %v1082, %v1081
            %v1104 = vpack.c.b16 %v1084, %v1083
            %v1105 = vpack.c.b16 %v1086, %v1085
            %v1106 = vpack.c.b16 %v1088, %v1087
            %v1107 = vpack.c.b16 %v1090, %v1089
            %v1108 = vpack.c.b16 %v1092, %v1091
            %1125 = vmatprep.subr.bf16.mxu0 0
            %1126 = vmatpush1.bf16.msra.mxu0 %v1093
            %1127 = vmatprep.subr.bf16.mxu0 0
            %1128 = vmatpush1.bf16.msra.mxu0 %v1094
            %1129 = vmatprep.subr.bf16.mxu0 0
            %1130 = vmatpush1.bf16.msra.mxu0 %v1095
            %1131 = vmatprep.subr.bf16.mxu0 0
            %1132 = vmatpush1.bf16.msra.mxu0 %v1096
            %1133 = vmatprep.subr.bf16.mxu0 0
            %1134 = vmatpush1.bf16.msra.mxu0 %v1097
            %1135 = vmatprep.subr.bf16.mxu0 0
            %1136 = vmatpush1.bf16.msra.mxu0 %v1098
            %1137 = vmatprep.subr.bf16.mxu0 0
            %1138 = vmatpush1.bf16.msra.mxu0 %v1099
            %1139 = vmatprep.subr.bf16.mxu0 0
            %1140 = vmatpush1.bf16.msra.mxu0 %v1100
            %1141 = vmatprep.subr.bf16.mxu0 0
            %1142 = vmatpush1.bf16.msra.mxu0 %v1101
            %1143 = vmatprep.subr.bf16.mxu0 0
            %1144 = vmatpush1.bf16.msra.mxu0 %v1102
            %1145 = vmatprep.subr.bf16.mxu0 0
            %1146 = vmatpush1.bf16.msra.mxu0 %v1103
            %1147 = vmatprep.subr.bf16.mxu0 0
            %1148 = vmatpush1.bf16.msra.mxu0 %v1104
            %1149 = vmatprep.subr.bf16.mxu0 0
            %1150 = vmatpush1.bf16.msra.mxu0 %v1105
            %1151 = vmatprep.subr.bf16.mxu0 0
            %1152 = vmatpush1.bf16.msra.mxu0 %v1106
            %1153 = vmatprep.subr.bf16.mxu0 0
            %1154 = vmatpush1.bf16.msra.mxu0 %v1107
            %1155 = vmatprep.subr.bf16.mxu0 0
            %1156 = vmatpush1.bf16.msra.mxu0 %v1108
            %1157 = vmatprep.mubr.bf16.mxu0 %v989
            %1158 = vmatmul.mubr.bf16.gmra.mrb[0].mxu0 %v988
            %v1159 = vpop.f32.mrb[0].mxu0
            %v1160 = vadd.f32 %v1027, %v1159
            %v1161 = vpop.f32.mrb[0].mxu0
            %v1162 = vpop.f32.mrb[0].mxu0
            %v1163 = vpop.f32.mrb[0].mxu0
            %1164 = vdwg.mxu0
            %1165 = vst.msk [vmem:[#allocation13] sm:$0xff] %vm421, %v1160
          $region92: #{tpu_custom_call.1} parent=75 // pred_fallthru
            _
        $region76: #{tpu_custom_call.1} parent=59 // pred_fallthru
          _
        // Predicated region
        $region97: #{tpu_custom_call.1} parent=59 // pred_check
          %p1166 = pneg %p273
        $region98: #{tpu_custom_call.1} parent=59 // pred_check_branch
          %1168 = sbr.rel (%p1166) target = $region100
        $region99: #{tpu_custom_call.1} parent=59 // pred_region
          %s1170 = ssub.s32 128, 128
          %1171 = vsyncadd [#allocation12], %s1170
          %s1172 = smul.addr %s28, 128
          %s1173 = scalar_lea.hbm %s10, %s1172
          %s1175 = sshll.u32 [#allocation13], 4
          %s1176 = int_to_ptr.vmem [resolvable:$true] %s1175
          %1178 = dma.vmem_to_hbm [thread:$0]  %s1176, 128, %s1173, [#allocation12]
        $region100: #{tpu_custom_call.1} parent=59 // pred_fallthru
          _
        // Predicated region
        $region101: #{tpu_custom_call.1} parent=59 // pred_check
          %p1179 = pneg %p273
        $region102: #{tpu_custom_call.1} parent=59 // pred_check_branch
          %1181 = sbr.rel (%p1179) target = $region104
        $region103: #{tpu_custom_call.1} parent=59 // pred_region
          %1182 = dma.done [#allocation12], 128
        $region104: #{tpu_custom_call.1} parent=59 // pred_fallthru
          _
      $region60: #{tpu_custom_call.1} parent=5 // pred_fallthru
        _
      %p1183 = scmp.le.s32.totalorder 2, %s18
      // Predicated region
      $region105: #{tpu_custom_call.1} parent=5 // pred_check
        %p1184 = pneg %p1183
      $region106: #{tpu_custom_call.1} parent=5 // pred_check_branch
        %1186 = sbr.rel (%p1184) target = $region108
      $region107: #{tpu_custom_call.1} parent=5 // pred_region
        %s1187 = ssub.s32 %s18, 2
      $region108: #{tpu_custom_call.1} parent=5 // pred_fallthru
        _
    $region6: #{tpu_custom_call.1} parent=1 // loop_footer
      %s22 = sadd.s32 1, %s18
    $region7: #{tpu_custom_call.1} parent=1 // loop_footer_branch
      %17 = sbr.rel target = $region3
    $region8: #{tpu_custom_call.1} parent=1 // loop_exit
      _
    %1188 = vsyncpa [#allocation11], 1
    %s1189 = scalar_lea.sflag [#allocation11], 1
    %1190 = vsyncpa %s1189, 1
    %1191 = vsyncpa [#allocation12], 1
    %s1192 = scalar_lea.sflag [#allocation12], 1
    %1193 = vsyncpa %s1192, 1

</llo_original>
